<compile_context>
chip_gen: v6e
topology: v6e:2x2x1
jax: 0.10.0
libtpu: 0.0.40
codegen_flags: <defaults>
</compile_context>

<pallas_src>
import jax
import jax.numpy as jnp
from jax.experimental import pallas as pl
from jax.experimental.pallas import tpu as pltpu

S, B, C = 7, 2, 20
D = B * 5 + C                  # 30 channels
SS = S * S                     # 49 grid cells
LAMBDA_NOOBJ = 0.5
LAMBDA_COORD = 5.0
EPS_IOU = 1e-6
EPS_SQRT = 1e-6

# per-sample normalizations (batch mean is applied in the wrapper)
W_BOX = LAMBDA_COORD / (S * S * 2)
W_OBJ = 1.0 / (S * S)
W_NOOBJ = LAMBDA_NOOBJ / (2 * S ** 3)      # reference rank-5 broadcast, batch==1 form
W_CLS = 1.0 / (S * S * C)


# ----------------------------------------------------------------------------
# Pallas kernel (one grid step per block of TB samples)
# ----------------------------------------------------------------------------
def yolo_loss_kernel(pool_ref, p_ref, t_ref, out_ref):
    # pool_ref : (2, 49, 49) f32   constant pooling matrices
    # p_ref    : (D, TB, 49) f32   predictions, channel-major, cells on lanes
    # t_ref    : (D, TB, 49) f32   targets, same layout
    # out_ref  : (1, 1, 1)   f32   per-block partial loss sum
    px, py, pw, ph, pc = (p_ref[c] for c in range(5))       # predicted box 1
    qx, qy, qw, qh, qc = (p_ref[c] for c in range(5, 10))   # predicted box 2
    tx, ty, tw, th, tc = (t_ref[c] for c in range(5))       # target box + conf
    exists = t_ref[20]                                        # (TB, 49)

    def inter_union(bx, by_, bw_, bh_):
        x1 = jnp.maximum(bx - 0.5 * bw_, tx - 0.5 * tw)
        y1 = jnp.maximum(by_ - 0.5 * bh_, ty - 0.5 * th)
        x2 = jnp.minimum(bx + 0.5 * bw_, tx + 0.5 * tw)
        y2 = jnp.minimum(by_ + 0.5 * bh_, ty + 0.5 * th)
        inter = jnp.maximum(x2 - x1, 0.0) * jnp.maximum(y2 - y1, 0.0)
        union = jnp.abs(bw_ * bh_) + jnp.abs(tw * th) - inter + EPS_IOU
        return inter, union

    i1, u1 = inter_union(px, py, pw, ph)
    i2, u2 = inter_union(qx, qy, qw, qh)
    # responsible box: cross-multiplied IoU compare (unions > 0); box 1 wins ties,
    # matching torch.max / jnp.argmax tie-breaking.
    best2 = (i2 * u1) > (i1 * u2)

    # --- coordinate (box) loss -------------------------------------------------
    bx = jnp.where(best2, qx, px)
    by = jnp.where(best2, qy, py)
    bw = jnp.sqrt(jnp.maximum(jnp.where(best2, qw, pw), EPS_SQRT))
    bh = jnp.sqrt(jnp.maximum(jnp.where(best2, qh, ph), EPS_SQRT))
    gw = jnp.sqrt(jnp.maximum(exists * tw, EPS_SQRT))
    gh = jnp.sqrt(jnp.maximum(exists * th, EPS_SQRT))
    box_sq = ((bx - exists * tx) ** 2 + (by - exists * ty) ** 2
              + (bw - gw) ** 2 + (bh - gh) ** 2)

    # --- object loss -------------------------------------------------------------
    conf = jnp.where(best2, qc, pc)
    obj_sq = (exists * conf - exists * tc) ** 2

    # --- no-object loss (exact batch==1 rank-5-broadcast semantics) --------------
    #   sum_{i,j,k,m} (1-e[j,k]) * (conf_m[j,k] - tc[i,j])**2
    # Expanding the square leaves only per-row sums of prediction-side maps and
    # per-column sums of tc / tc^2, which are produced *spread per lane* with two
    # constant pooling matmuls; each grid row j appears S times, hence the 1/S.
    w_no = 1.0 - exists
    quad = pc * pc + qc * qc
    wl = w_no * (pc + qc)
    tc2 = tc * tc
    m_row = pool_ref[0]                    # [a,b] = 1 iff row(a) == row(b)
    m_cross = pool_ref[1]                  # [a,b] = 1 iff col(a) == row(b)
    b_sp = jnp.dot(wl, m_row, preferred_element_type=jnp.float32)
    c_sp = jnp.dot(w_no, m_row, preferred_element_type=jnp.float32)
    d_sp = jnp.dot(tc, m_cross, preferred_element_type=jnp.float32)
    e_sp = jnp.dot(tc2, m_cross, preferred_element_type=jnp.float32)
    noobj_map = (float(S) * w_no * quad
                 + (-2.0 * b_sp * d_sp + 2.0 * c_sp * e_sp) * (1.0 / S))

    # --- class loss: exists**2 * sum_c (p_c - t_c)**2 ----------------------------
    g = jnp.zeros_like(exists)
    for c in range(C):
        dc = p_ref[10 + c] - t_ref[10 + c]
        g = g + dc * dc

    # --- single fused per-lane map + ONE full reduction per block -----------------
    cell = (W_BOX * box_sq + W_OBJ * obj_sq + W_NOOBJ * noobj_map
            + W_CLS * (exists * exists) * g)
    out_ref[0] = jnp.sum(jnp.sum(cell, axis=-1, keepdims=True),
                         axis=-2, keepdims=True)


# ----------------------------------------------------------------------------
# Wrapper
# ----------------------------------------------------------------------------
def _pick_tb(n):
    """Samples per grid block: multiple of 8, <=128, >=2 blocks when batch allows."""
    if n >= 256:
        return 128
    if n >= 16:
        return min(128, (((n + 1) // 2) + 7) // 8 * 8)
    return 8


@jax.jit
def yolo_loss(predictions, target):
    preds = jnp.asarray(predictions, jnp.float32).reshape(-1, S, S, D)
    tgt = jnp.asarray(target, jnp.float32).reshape(-1, S, S, D)
    n = preds.shape[0]
    tb = _pick_tb(n)
    nb = -(-n // tb)
    n_pad = nb * tb

    # channel-major, cells-on-lanes layout: (D, N_pad, S*S); lane index = row*S + col.
    p_cm = jnp.transpose(preds.reshape(n, SS, D), (2, 0, 1))
    t_cm = jnp.transpose(tgt.reshape(n, SS, D), (2, 0, 1))
    if n_pad != n:
        pad = ((0, 0), (0, n_pad - n), (0, 0))
        p_cm = jnp.pad(p_cm, pad)          # zero samples contribute exactly 0 loss
        t_cm = jnp.pad(t_cm, pad)

    # constant (49,49) pooling matrices (built once at trace time, passed as an input)
    lid = jnp.arange(SS)
    row = lid // S
    col = lid % S
    m_row = (row[:, None] == row[None, :]).astype(jnp.float32)
    m_cross = (col[:, None] == row[None, :]).astype(jnp.float32)
    pool = jnp.stack([m_row, m_cross])

    partial = pl.pallas_call(
        yolo_loss_kernel,
        out_shape=jax.ShapeDtypeStruct((nb, 1, 1), jnp.float32),
        grid=(nb,),
        in_specs=[pl.BlockSpec((2, SS, SS), lambda i: (0, 0, 0)),
                  pl.BlockSpec((D, tb, SS), lambda i: (0, i, 0)),
                  pl.BlockSpec((D, tb, SS), lambda i: (0, i, 0))],
        out_specs=pl.BlockSpec((1, 1, 1), lambda i: (i, 0, 0)),
        compiler_params=pltpu.CompilerParams(
            dimension_semantics=("parallel",)),   # megacore sharding on v7x
    )(pool, p_cm, t_cm)
    # every term's per-sample normalization is already baked into W_*; dividing the
    # block-partial sums by the true N gives the mean of per-sample losses.
    return jnp.sum(partial) / n


# ----------------------------------------------------------------------------
# Pure-JAX reference (direct port of the PyTorch forward; valid for batch==1)
# ----------------------------------------------------------------------------
def _iou_ref(bp, bt):
    b1x1 = bp[..., 0] - bp[..., 2] / 2
    b1y1 = bp[..., 1] - bp[..., 3] / 2
    b1x2 = bp[..., 0] + bp[..., 2] / 2
    b1y2 = bp[..., 1] + bp[..., 3] / 2
    b2x1 = bt[..., 0] - bt[..., 2] / 2
    b2y1 = bt[..., 1] - bt[..., 3] / 2
    b2x2 = bt[..., 0] + bt[..., 2] / 2
    b2y2 = bt[..., 1] + bt[..., 3] / 2
    x1 = jnp.maximum(b1x1, b2x1)
    y1 = jnp.maximum(b1y1, b2y1)
    x2 = jnp.minimum(b1x2, b2x2)
    y2 = jnp.minimum(b1y2, b2y2)
    inter = jnp.maximum(x2 - x1, 0.0) * jnp.maximum(y2 - y1, 0.0)
    a1 = jnp.abs((b1x2 - b1x1) * (b1y2 - b1y1))
    a2 = jnp.abs((b2x2 - b2x1) * (b2y2 - b2y1))
    return inter / (a1 + a2 - inter + EPS_IOU)


def yolo_loss_ref(predictions, target):
    pred = jnp.asarray(predictions, jnp.float32).reshape(-1, S, S, D)
    target = jnp.asarray(target, jnp.float32)
    iou1 = _iou_ref(pred[..., 0:4], target[..., 0:4])
    iou2 = _iou_ref(pred[..., 5:9], target[..., 0:4])
    ious = jnp.stack([iou1, iou2], axis=0)
    bestbox = jnp.argmax(ious, axis=0)
    exists = target[..., 20][..., None]
    box_pred = jnp.where(bestbox[..., None] == 1, pred[..., 5:9], pred[..., 0:4])
    box_tgt = exists * target[..., 0:4]
    box_pred = box_pred.at[..., 2:4].set(jnp.sqrt(jnp.maximum(box_pred[..., 2:4], EPS_SQRT)))
    box_tgt = box_tgt.at[..., 2:4].set(jnp.sqrt(jnp.maximum(box_tgt[..., 2:4], EPS_SQRT)))
    box_loss = LAMBDA_COORD * jnp.mean((box_pred[..., :2] - box_tgt[..., :2]) ** 2
                                       + (box_pred[..., 2:4] - box_tgt[..., 2:4]) ** 2)
    conf_p = jnp.where(bestbox[..., None] == 1, pred[..., 9:10], pred[..., 4:5])
    object_loss = jnp.mean((exists * conf_p - exists * target[..., 4:5]) ** 2)
    no_obj = jnp.mean((1 - exists) * (pred[..., jnp.array([4, 9])]
                                      - target[..., 4:5][..., None]) ** 2)
    class_loss = jnp.mean((exists * pred[..., 10:10 + C]
                           - exists * target[..., 10:10 + C]) ** 2)
    return box_loss + object_loss + LAMBDA_NOOBJ * no_obj + class_loss


# ----------------------------------------------------------------------------
if __name__ == "__main__":
    key = jax.random.PRNGKey(0)
    k1, k2, k3 = jax.random.split(key, 3)

    N = 20                                        # exercises multi-block + zero padding
    predictions = jax.random.normal(k1, (N, S * S * D), jnp.float32)
    target = jax.random.uniform(k2, (N, S, S, D), jnp.float32)
    exists_mask = (jax.random.uniform(k3, (N, S, S)) > 0.5).astype(jnp.float32)
    target = target.at[..., 20].set(exists_mask)

    # batched run (blocks of samples as a parallel grid axis)
    loss = jax.block_until_ready(yolo_loss(predictions, target))
    ref_fn = jax.jit(yolo_loss_ref)
    ref = jnp.mean(jnp.stack(
        [ref_fn(predictions[i:i + 1], target[i:i + 1]) for i in range(N)]))

    # exact single-sample check (the only batch size at which the original module runs)
    loss1 = jax.block_until_ready(yolo_loss(predictions[:1], target[:1]))
    ref1 = ref_fn(predictions[:1], target[:1])

    if not (bool(jnp.isfinite(loss)) and bool(jnp.isfinite(loss1))):
        raise AssertionError("non-finite loss from kernel")
    if not bool(jnp.allclose(loss, ref, rtol=1e-3, atol=1e-3)):
        raise AssertionError(f"batched mismatch: kernel={float(loss)} ref={float(ref)}")
    if not bool(jnp.allclose(loss1, ref1, rtol=1e-3, atol=1e-3)):
        raise AssertionError(f"single mismatch: kernel={float(loss1)} ref={float(ref1)}")

    print("KERNEL_OK")
</pallas_src>

<mosaic_0001>
module attributes {stable_mosaic.version = 11 : i64} {
  func.func @yolo_loss_kernel(%arg0: i32, %arg1: memref<2x49x49xf32, #tpu.memory_space<vmem>>, %arg2: memref<30x16x49xf32, #tpu.memory_space<vmem>>, %arg3: memref<30x16x49xf32, #tpu.memory_space<vmem>>, %arg4: memref<1x1x1xf32, #tpu.memory_space<vmem>>) attributes {dimension_semantics = [#tpu.dimension_semantics<parallel>], iteration_bounds = array<i64: 2>, scalar_prefetch = 0 : i64, scratch_operands = 0 : i64, tpu.core_type = #tpu.core_type<tc>, window_params = [{pipeline_mode = #tpu.pipeline_mode<synchronous>, transform_indices = @transform_0, window_bounds = array<i64: 2, 49, 49>}, {transform_indices = @transform_1, window_bounds = array<i64: 30, 16, 49>}, {transform_indices = @transform_2, window_bounds = array<i64: 30, 16, 49>}, {transform_indices = @transform_3, window_bounds = array<i64: 1, 1, 1>}]} {
    %c0 = arith.constant 0 : index
    %c0_0 = arith.constant 0 : index
    %c0_1 = arith.constant 0 : index
    %0 = vector.load %arg2[%c0, %c0_0, %c0_1] : memref<30x16x49xf32, #tpu.memory_space<vmem>>, vector<1x16x49xf32>
    %1 = vector.shape_cast %0 : vector<1x16x49xf32> to vector<16x49xf32>
    %c1 = arith.constant 1 : index
    %c0_2 = arith.constant 0 : index
    %c0_3 = arith.constant 0 : index
    %2 = vector.load %arg2[%c1, %c0_2, %c0_3] : memref<30x16x49xf32, #tpu.memory_space<vmem>>, vector<1x16x49xf32>
    %3 = vector.shape_cast %2 : vector<1x16x49xf32> to vector<16x49xf32>
    %c2 = arith.constant 2 : index
    %c0_4 = arith.constant 0 : index
    %c0_5 = arith.constant 0 : index
    %4 = vector.load %arg2[%c2, %c0_4, %c0_5] : memref<30x16x49xf32, #tpu.memory_space<vmem>>, vector<1x16x49xf32>
    %5 = vector.shape_cast %4 : vector<1x16x49xf32> to vector<16x49xf32>
    %c3 = arith.constant 3 : index
    %c0_6 = arith.constant 0 : index
    %c0_7 = arith.constant 0 : index
    %6 = vector.load %arg2[%c3, %c0_6, %c0_7] : memref<30x16x49xf32, #tpu.memory_space<vmem>>, vector<1x16x49xf32>
    %7 = vector.shape_cast %6 : vector<1x16x49xf32> to vector<16x49xf32>
    %c4 = arith.constant 4 : index
    %c0_8 = arith.constant 0 : index
    %c0_9 = arith.constant 0 : index
    %8 = vector.load %arg2[%c4, %c0_8, %c0_9] : memref<30x16x49xf32, #tpu.memory_space<vmem>>, vector<1x16x49xf32>
    %9 = vector.shape_cast %8 : vector<1x16x49xf32> to vector<16x49xf32>
    %c5 = arith.constant 5 : index
    %c0_10 = arith.constant 0 : index
    %c0_11 = arith.constant 0 : index
    %10 = vector.load %arg2[%c5, %c0_10, %c0_11] : memref<30x16x49xf32, #tpu.memory_space<vmem>>, vector<1x16x49xf32>
    %11 = vector.shape_cast %10 : vector<1x16x49xf32> to vector<16x49xf32>
    %c6 = arith.constant 6 : index
    %c0_12 = arith.constant 0 : index
    %c0_13 = arith.constant 0 : index
    %12 = vector.load %arg2[%c6, %c0_12, %c0_13] : memref<30x16x49xf32, #tpu.memory_space<vmem>>, vector<1x16x49xf32>
    %13 = vector.shape_cast %12 : vector<1x16x49xf32> to vector<16x49xf32>
    %c7 = arith.constant 7 : index
    %c0_14 = arith.constant 0 : index
    %c0_15 = arith.constant 0 : index
    %14 = vector.load %arg2[%c7, %c0_14, %c0_15] : memref<30x16x49xf32, #tpu.memory_space<vmem>>, vector<1x16x49xf32>
    %15 = vector.shape_cast %14 : vector<1x16x49xf32> to vector<16x49xf32>
    %c8 = arith.constant 8 : index
    %c0_16 = arith.constant 0 : index
    %c0_17 = arith.constant 0 : index
    %16 = vector.load %arg2[%c8, %c0_16, %c0_17] : memref<30x16x49xf32, #tpu.memory_space<vmem>>, vector<1x16x49xf32>
    %17 = vector.shape_cast %16 : vector<1x16x49xf32> to vector<16x49xf32>
    %c9 = arith.constant 9 : index
    %c0_18 = arith.constant 0 : index
    %c0_19 = arith.constant 0 : index
    %18 = vector.load %arg2[%c9, %c0_18, %c0_19] : memref<30x16x49xf32, #tpu.memory_space<vmem>>, vector<1x16x49xf32>
    %19 = vector.shape_cast %18 : vector<1x16x49xf32> to vector<16x49xf32>
    %c0_20 = arith.constant 0 : index
    %c0_21 = arith.constant 0 : index
    %c0_22 = arith.constant 0 : index
    %20 = vector.load %arg3[%c0_20, %c0_21, %c0_22] : memref<30x16x49xf32, #tpu.memory_space<vmem>>, vector<1x16x49xf32>
    %21 = vector.shape_cast %20 : vector<1x16x49xf32> to vector<16x49xf32>
    %c1_23 = arith.constant 1 : index
    %c0_24 = arith.constant 0 : index
    %c0_25 = arith.constant 0 : index
    %22 = vector.load %arg3[%c1_23, %c0_24, %c0_25] : memref<30x16x49xf32, #tpu.memory_space<vmem>>, vector<1x16x49xf32>
    %23 = vector.shape_cast %22 : vector<1x16x49xf32> to vector<16x49xf32>
    %c2_26 = arith.constant 2 : index
    %c0_27 = arith.constant 0 : index
    %c0_28 = arith.constant 0 : index
    %24 = vector.load %arg3[%c2_26, %c0_27, %c0_28] : memref<30x16x49xf32, #tpu.memory_space<vmem>>, vector<1x16x49xf32>
    %25 = vector.shape_cast %24 : vector<1x16x49xf32> to vector<16x49xf32>
    %c3_29 = arith.constant 3 : index
    %c0_30 = arith.constant 0 : index
    %c0_31 = arith.constant 0 : index
    %26 = vector.load %arg3[%c3_29, %c0_30, %c0_31] : memref<30x16x49xf32, #tpu.memory_space<vmem>>, vector<1x16x49xf32>
    %27 = vector.shape_cast %26 : vector<1x16x49xf32> to vector<16x49xf32>
    %c4_32 = arith.constant 4 : index
    %c0_33 = arith.constant 0 : index
    %c0_34 = arith.constant 0 : index
    %28 = vector.load %arg3[%c4_32, %c0_33, %c0_34] : memref<30x16x49xf32, #tpu.memory_space<vmem>>, vector<1x16x49xf32>
    %29 = vector.shape_cast %28 : vector<1x16x49xf32> to vector<16x49xf32>
    %c20 = arith.constant 20 : index
    %c0_35 = arith.constant 0 : index
    %c0_36 = arith.constant 0 : index
    %30 = vector.load %arg3[%c20, %c0_35, %c0_36] : memref<30x16x49xf32, #tpu.memory_space<vmem>>, vector<1x16x49xf32>
    %31 = vector.shape_cast %30 : vector<1x16x49xf32> to vector<16x49xf32>
    %cst = arith.constant 5.000000e-01 : f32
    %32 = vector.broadcast %cst : f32 to vector<16x49xf32>
    %33 = arith.mulf %32, %5 : vector<16x49xf32>
    %34 = arith.subf %1, %33 : vector<16x49xf32>
    %cst_37 = arith.constant 5.000000e-01 : f32
    %35 = vector.broadcast %cst_37 : f32 to vector<16x49xf32>
    %36 = arith.mulf %35, %25 : vector<16x49xf32>
    %37 = arith.subf %21, %36 : vector<16x49xf32>
    %38 = arith.maximumf %34, %37 : vector<16x49xf32>
    %cst_38 = arith.constant 5.000000e-01 : f32
    %39 = vector.broadcast %cst_38 : f32 to vector<16x49xf32>
    %40 = arith.mulf %39, %7 : vector<16x49xf32>
    %41 = arith.subf %3, %40 : vector<16x49xf32>
    %cst_39 = arith.constant 5.000000e-01 : f32
    %42 = vector.broadcast %cst_39 : f32 to vector<16x49xf32>
    %43 = arith.mulf %42, %27 : vector<16x49xf32>
    %44 = arith.subf %23, %43 : vector<16x49xf32>
    %45 = arith.maximumf %41, %44 : vector<16x49xf32>
    %cst_40 = arith.constant 5.000000e-01 : f32
    %46 = vector.broadcast %cst_40 : f32 to vector<16x49xf32>
    %47 = arith.mulf %46, %5 : vector<16x49xf32>
    %48 = arith.addf %1, %47 : vector<16x49xf32>
    %cst_41 = arith.constant 5.000000e-01 : f32
    %49 = vector.broadcast %cst_41 : f32 to vector<16x49xf32>
    %50 = arith.mulf %49, %25 : vector<16x49xf32>
    %51 = arith.addf %21, %50 : vector<16x49xf32>
    %52 = arith.minimumf %48, %51 : vector<16x49xf32>
    %cst_42 = arith.constant 5.000000e-01 : f32
    %53 = vector.broadcast %cst_42 : f32 to vector<16x49xf32>
    %54 = arith.mulf %53, %7 : vector<16x49xf32>
    %55 = arith.addf %3, %54 : vector<16x49xf32>
    %cst_43 = arith.constant 5.000000e-01 : f32
    %56 = vector.broadcast %cst_43 : f32 to vector<16x49xf32>
    %57 = arith.mulf %56, %27 : vector<16x49xf32>
    %58 = arith.addf %23, %57 : vector<16x49xf32>
    %59 = arith.minimumf %55, %58 : vector<16x49xf32>
    %60 = arith.subf %52, %38 : vector<16x49xf32>
    %cst_44 = arith.constant 0.000000e+00 : f32
    %61 = vector.broadcast %cst_44 : f32 to vector<16x49xf32>
    %62 = arith.maximumf %60, %61 : vector<16x49xf32>
    %63 = arith.subf %59, %45 : vector<16x49xf32>
    %cst_45 = arith.constant 0.000000e+00 : f32
    %64 = vector.broadcast %cst_45 : f32 to vector<16x49xf32>
    %65 = arith.maximumf %63, %64 : vector<16x49xf32>
    %66 = arith.mulf %62, %65 : vector<16x49xf32>
    %67 = arith.mulf %5, %7 : vector<16x49xf32>
    %68 = math.absf %67 : vector<16x49xf32>
    %69 = arith.mulf %25, %27 : vector<16x49xf32>
    %70 = math.absf %69 : vector<16x49xf32>
    %71 = arith.addf %68, %70 : vector<16x49xf32>
    %72 = arith.subf %71, %66 : vector<16x49xf32>
    %cst_46 = arith.constant 9.99999997E-7 : f32
    %73 = vector.broadcast %cst_46 : f32 to vector<16x49xf32>
    %74 = arith.addf %72, %73 : vector<16x49xf32>
    %cst_47 = arith.constant 5.000000e-01 : f32
    %75 = vector.broadcast %cst_47 : f32 to vector<16x49xf32>
    %76 = arith.mulf %75, %15 : vector<16x49xf32>
    %77 = arith.subf %11, %76 : vector<16x49xf32>
    %cst_48 = arith.constant 5.000000e-01 : f32
    %78 = vector.broadcast %cst_48 : f32 to vector<16x49xf32>
    %79 = arith.mulf %78, %25 : vector<16x49xf32>
    %80 = arith.subf %21, %79 : vector<16x49xf32>
    %81 = arith.maximumf %77, %80 : vector<16x49xf32>
    %cst_49 = arith.constant 5.000000e-01 : f32
    %82 = vector.broadcast %cst_49 : f32 to vector<16x49xf32>
    %83 = arith.mulf %82, %17 : vector<16x49xf32>
    %84 = arith.subf %13, %83 : vector<16x49xf32>
    %cst_50 = arith.constant 5.000000e-01 : f32
    %85 = vector.broadcast %cst_50 : f32 to vector<16x49xf32>
    %86 = arith.mulf %85, %27 : vector<16x49xf32>
    %87 = arith.subf %23, %86 : vector<16x49xf32>
    %88 = arith.maximumf %84, %87 : vector<16x49xf32>
    %cst_51 = arith.constant 5.000000e-01 : f32
    %89 = vector.broadcast %cst_51 : f32 to vector<16x49xf32>
    %90 = arith.mulf %89, %15 : vector<16x49xf32>
    %91 = arith.addf %11, %90 : vector<16x49xf32>
    %cst_52 = arith.constant 5.000000e-01 : f32
    %92 = vector.broadcast %cst_52 : f32 to vector<16x49xf32>
    %93 = arith.mulf %92, %25 : vector<16x49xf32>
    %94 = arith.addf %21, %93 : vector<16x49xf32>
    %95 = arith.minimumf %91, %94 : vector<16x49xf32>
    %cst_53 = arith.constant 5.000000e-01 : f32
    %96 = vector.broadcast %cst_53 : f32 to vector<16x49xf32>
    %97 = arith.mulf %96, %17 : vector<16x49xf32>
    %98 = arith.addf %13, %97 : vector<16x49xf32>
    %cst_54 = arith.constant 5.000000e-01 : f32
    %99 = vector.broadcast %cst_54 : f32 to vector<16x49xf32>
    %100 = arith.mulf %99, %27 : vector<16x49xf32>
    %101 = arith.addf %23, %100 : vector<16x49xf32>
    %102 = arith.minimumf %98, %101 : vector<16x49xf32>
    %103 = arith.subf %95, %81 : vector<16x49xf32>
    %cst_55 = arith.constant 0.000000e+00 : f32
    %104 = vector.broadcast %cst_55 : f32 to vector<16x49xf32>
    %105 = arith.maximumf %103, %104 : vector<16x49xf32>
    %106 = arith.subf %102, %88 : vector<16x49xf32>
    %cst_56 = arith.constant 0.000000e+00 : f32
    %107 = vector.broadcast %cst_56 : f32 to vector<16x49xf32>
    %108 = arith.maximumf %106, %107 : vector<16x49xf32>
    %109 = arith.mulf %105, %108 : vector<16x49xf32>
    %110 = arith.mulf %15, %17 : vector<16x49xf32>
    %111 = math.absf %110 : vector<16x49xf32>
    %112 = arith.mulf %25, %27 : vector<16x49xf32>
    %113 = math.absf %112 : vector<16x49xf32>
    %114 = arith.addf %111, %113 : vector<16x49xf32>
    %115 = arith.subf %114, %109 : vector<16x49xf32>
    %cst_57 = arith.constant 9.99999997E-7 : f32
    %116 = vector.broadcast %cst_57 : f32 to vector<16x49xf32>
    %117 = arith.addf %115, %116 : vector<16x49xf32>
    %118 = arith.mulf %109, %74 : vector<16x49xf32>
    %119 = arith.mulf %66, %117 : vector<16x49xf32>
    %120 = arith.cmpf ogt, %118, %119 : vector<16x49xf32>
    %121 = arith.select %120, %11, %1 : vector<16x49xi1>, vector<16x49xf32>
    %122 = arith.select %120, %13, %3 : vector<16x49xi1>, vector<16x49xf32>
    %123 = arith.select %120, %15, %5 : vector<16x49xi1>, vector<16x49xf32>
    %cst_58 = arith.constant 9.99999997E-7 : f32
    %124 = vector.broadcast %cst_58 : f32 to vector<16x49xf32>
    %125 = arith.maximumf %123, %124 : vector<16x49xf32>
    %126 = math.sqrt %125 : vector<16x49xf32>
    %127 = arith.select %120, %17, %7 : vector<16x49xi1>, vector<16x49xf32>
    %cst_59 = arith.constant 9.99999997E-7 : f32
    %128 = vector.broadcast %cst_59 : f32 to vector<16x49xf32>
    %129 = arith.maximumf %127, %128 : vector<16x49xf32>
    %130 = math.sqrt %129 : vector<16x49xf32>
    %131 = arith.mulf %31, %25 : vector<16x49xf32>
    %cst_60 = arith.constant 9.99999997E-7 : f32
    %132 = vector.broadcast %cst_60 : f32 to vector<16x49xf32>
    %133 = arith.maximumf %131, %132 : vector<16x49xf32>
    %134 = math.sqrt %133 : vector<16x49xf32>
    %135 = arith.mulf %31, %27 : vector<16x49xf32>
    %cst_61 = arith.constant 9.99999997E-7 : f32
    %136 = vector.broadcast %cst_61 : f32 to vector<16x49xf32>
    %137 = arith.maximumf %135, %136 : vector<16x49xf32>
    %138 = math.sqrt %137 : vector<16x49xf32>
    %139 = arith.mulf %31, %21 : vector<16x49xf32>
    %140 = arith.subf %121, %139 : vector<16x49xf32>
    %141 = arith.mulf %140, %140 : vector<16x49xf32>
    %142 = arith.mulf %31, %23 : vector<16x49xf32>
    %143 = arith.subf %122, %142 : vector<16x49xf32>
    %144 = arith.mulf %143, %143 : vector<16x49xf32>
    %145 = arith.addf %141, %144 : vector<16x49xf32>
    %146 = arith.subf %126, %134 : vector<16x49xf32>
    %147 = arith.mulf %146, %146 : vector<16x49xf32>
    %148 = arith.addf %145, %147 : vector<16x49xf32>
    %149 = arith.subf %130, %138 : vector<16x49xf32>
    %150 = arith.mulf %149, %149 : vector<16x49xf32>
    %151 = arith.addf %148, %150 : vector<16x49xf32>
    %152 = arith.select %120, %19, %9 : vector<16x49xi1>, vector<16x49xf32>
    %153 = arith.mulf %31, %152 : vector<16x49xf32>
    %154 = arith.mulf %31, %29 : vector<16x49xf32>
    %155 = arith.subf %153, %154 : vector<16x49xf32>
    %156 = arith.mulf %155, %155 : vector<16x49xf32>
    %cst_62 = arith.constant 1.000000e+00 : f32
    %157 = vector.broadcast %cst_62 : f32 to vector<16x49xf32>
    %158 = arith.subf %157, %31 : vector<16x49xf32>
    %159 = arith.mulf %9, %9 : vector<16x49xf32>
    %160 = arith.mulf %19, %19 : vector<16x49xf32>
    %161 = arith.addf %159, %160 : vector<16x49xf32>
    %162 = arith.addf %9, %19 : vector<16x49xf32>
    %163 = arith.mulf %158, %162 : vector<16x49xf32>
    %164 = arith.mulf %29, %29 : vector<16x49xf32>
    %c0_63 = arith.constant 0 : index
    %c0_64 = arith.constant 0 : index
    %c0_65 = arith.constant 0 : index
    %165 = vector.load %arg1[%c0_63, %c0_64, %c0_65] : memref<2x49x49xf32, #tpu.memory_space<vmem>>, vector<1x49x49xf32>
    %166 = vector.shape_cast %165 : vector<1x49x49xf32> to vector<49x49xf32>
    %c1_66 = arith.constant 1 : index
    %c0_67 = arith.constant 0 : index
    %c0_68 = arith.constant 0 : index
    %167 = vector.load %arg1[%c1_66, %c0_67, %c0_68] : memref<2x49x49xf32, #tpu.memory_space<vmem>>, vector<1x49x49xf32>
    %168 = vector.shape_cast %167 : vector<1x49x49xf32> to vector<49x49xf32>
    %cst_69 = arith.constant dense<0.000000e+00> : vector<16x49xf32>
    %169 = tpu.matmul %163, %166, %cst_69 {dimension_numbers = #tpu.dot_dimension_numbers<[1], [0], [0], [1], [0, 0, 1, 1], [], []>} : vector<16x49xf32>, vector<49x49xf32>, vector<16x49xf32> -> vector<16x49xf32>
    %cst_70 = arith.constant dense<0.000000e+00> : vector<16x49xf32>
    %170 = tpu.matmul %158, %166, %cst_70 {dimension_numbers = #tpu.dot_dimension_numbers<[1], [0], [0], [1], [0, 0, 1, 1], [], []>} : vector<16x49xf32>, vector<49x49xf32>, vector<16x49xf32> -> vector<16x49xf32>
    %cst_71 = arith.constant dense<0.000000e+00> : vector<16x49xf32>
    %171 = tpu.matmul %29, %168, %cst_71 {dimension_numbers = #tpu.dot_dimension_numbers<[1], [0], [0], [1], [0, 0, 1, 1], [], []>} : vector<16x49xf32>, vector<49x49xf32>, vector<16x49xf32> -> vector<16x49xf32>
    %cst_72 = arith.constant dense<0.000000e+00> : vector<16x49xf32>
    %172 = tpu.matmul %164, %168, %cst_72 {dimension_numbers = #tpu.dot_dimension_numbers<[1], [0], [0], [1], [0, 0, 1, 1], [], []>} : vector<16x49xf32>, vector<49x49xf32>, vector<16x49xf32> -> vector<16x49xf32>
    %cst_73 = arith.constant 7.000000e+00 : f32
    %173 = vector.broadcast %cst_73 : f32 to vector<16x49xf32>
    %174 = arith.mulf %173, %158 : vector<16x49xf32>
    %175 = arith.mulf %174, %161 : vector<16x49xf32>
    %cst_74 = arith.constant -2.000000e+00 : f32
    %176 = vector.broadcast %cst_74 : f32 to vector<16x49xf32>
    %177 = arith.mulf %176, %169 : vector<16x49xf32>
    %178 = arith.mulf %177, %171 : vector<16x49xf32>
    %cst_75 = arith.constant 2.000000e+00 : f32
    %179 = vector.broadcast %cst_75 : f32 to vector<16x49xf32>
    %180 = arith.mulf %179, %170 : vector<16x49xf32>
    %181 = arith.mulf %180, %172 : vector<16x49xf32>
    %182 = arith.addf %178, %181 : vector<16x49xf32>
    %cst_76 = arith.constant 0.142857149 : f32
    %183 = vector.broadcast %cst_76 : f32 to vector<16x49xf32>
    %184 = arith.mulf %182, %183 : vector<16x49xf32>
    %185 = arith.addf %175, %184 : vector<16x49xf32>
    %cst_77 = arith.constant 0.000000e+00 : f32
    %186 = vector.broadcast %cst_77 : f32 to vector<16x49xf32>
    %c10 = arith.constant 10 : index
    %c0_78 = arith.constant 0 : index
    %c0_79 = arith.constant 0 : index
    %187 = vector.load %arg2[%c10, %c0_78, %c0_79] : memref<30x16x49xf32, #tpu.memory_space<vmem>>, vector<1x16x49xf32>
    %188 = vector.shape_cast %187 : vector<1x16x49xf32> to vector<16x49xf32>
    %c10_80 = arith.constant 10 : index
    %c0_81 = arith.constant 0 : index
    %c0_82 = arith.constant 0 : index
    %189 = vector.load %arg3[%c10_80, %c0_81, %c0_82] : memref<30x16x49xf32, #tpu.memory_space<vmem>>, vector<1x16x49xf32>
    %190 = vector.shape_cast %189 : vector<1x16x49xf32> to vector<16x49xf32>
    %191 = arith.subf %188, %190 : vector<16x49xf32>
    %192 = arith.mulf %191, %191 : vector<16x49xf32>
    %193 = arith.addf %186, %192 : vector<16x49xf32>
    %c11 = arith.constant 11 : index
    %c0_83 = arith.constant 0 : index
    %c0_84 = arith.constant 0 : index
    %194 = vector.load %arg2[%c11, %c0_83, %c0_84] : memref<30x16x49xf32, #tpu.memory_space<vmem>>, vector<1x16x49xf32>
    %195 = vector.shape_cast %194 : vector<1x16x49xf32> to vector<16x49xf32>
    %c11_85 = arith.constant 11 : index
    %c0_86 = arith.constant 0 : index
    %c0_87 = arith.constant 0 : index
    %196 = vector.load %arg3[%c11_85, %c0_86, %c0_87] : memref<30x16x49xf32, #tpu.memory_space<vmem>>, vector<1x16x49xf32>
    %197 = vector.shape_cast %196 : vector<1x16x49xf32> to vector<16x49xf32>
    %198 = arith.subf %195, %197 : vector<16x49xf32>
    %199 = arith.mulf %198, %198 : vector<16x49xf32>
    %200 = arith.addf %193, %199 : vector<16x49xf32>
    %c12 = arith.constant 12 : index
    %c0_88 = arith.constant 0 : index
    %c0_89 = arith.constant 0 : index
    %201 = vector.load %arg2[%c12, %c0_88, %c0_89] : memref<30x16x49xf32, #tpu.memory_space<vmem>>, vector<1x16x49xf32>
    %202 = vector.shape_cast %201 : vector<1x16x49xf32> to vector<16x49xf32>
    %c12_90 = arith.constant 12 : index
    %c0_91 = arith.constant 0 : index
    %c0_92 = arith.constant 0 : index
    %203 = vector.load %arg3[%c12_90, %c0_91, %c0_92] : memref<30x16x49xf32, #tpu.memory_space<vmem>>, vector<1x16x49xf32>
    %204 = vector.shape_cast %203 : vector<1x16x49xf32> to vector<16x49xf32>
    %205 = arith.subf %202, %204 : vector<16x49xf32>
    %206 = arith.mulf %205, %205 : vector<16x49xf32>
    %207 = arith.addf %200, %206 : vector<16x49xf32>
    %c13 = arith.constant 13 : index
    %c0_93 = arith.constant 0 : index
    %c0_94 = arith.constant 0 : index
    %208 = vector.load %arg2[%c13, %c0_93, %c0_94] : memref<30x16x49xf32, #tpu.memory_space<vmem>>, vector<1x16x49xf32>
    %209 = vector.shape_cast %208 : vector<1x16x49xf32> to vector<16x49xf32>
    %c13_95 = arith.constant 13 : index
    %c0_96 = arith.constant 0 : index
    %c0_97 = arith.constant 0 : index
    %210 = vector.load %arg3[%c13_95, %c0_96, %c0_97] : memref<30x16x49xf32, #tpu.memory_space<vmem>>, vector<1x16x49xf32>
    %211 = vector.shape_cast %210 : vector<1x16x49xf32> to vector<16x49xf32>
    %212 = arith.subf %209, %211 : vector<16x49xf32>
    %213 = arith.mulf %212, %212 : vector<16x49xf32>
    %214 = arith.addf %207, %213 : vector<16x49xf32>
    %c14 = arith.constant 14 : index
    %c0_98 = arith.constant 0 : index
    %c0_99 = arith.constant 0 : index
    %215 = vector.load %arg2[%c14, %c0_98, %c0_99] : memref<30x16x49xf32, #tpu.memory_space<vmem>>, vector<1x16x49xf32>
    %216 = vector.shape_cast %215 : vector<1x16x49xf32> to vector<16x49xf32>
    %c14_100 = arith.constant 14 : index
    %c0_101 = arith.constant 0 : index
    %c0_102 = arith.constant 0 : index
    %217 = vector.load %arg3[%c14_100, %c0_101, %c0_102] : memref<30x16x49xf32, #tpu.memory_space<vmem>>, vector<1x16x49xf32>
    %218 = vector.shape_cast %217 : vector<1x16x49xf32> to vector<16x49xf32>
    %219 = arith.subf %216, %218 : vector<16x49xf32>
    %220 = arith.mulf %219, %219 : vector<16x49xf32>
    %221 = arith.addf %214, %220 : vector<16x49xf32>
    %c15 = arith.constant 15 : index
    %c0_103 = arith.constant 0 : index
    %c0_104 = arith.constant 0 : index
    %222 = vector.load %arg2[%c15, %c0_103, %c0_104] : memref<30x16x49xf32, #tpu.memory_space<vmem>>, vector<1x16x49xf32>
    %223 = vector.shape_cast %222 : vector<1x16x49xf32> to vector<16x49xf32>
    %c15_105 = arith.constant 15 : index
    %c0_106 = arith.constant 0 : index
    %c0_107 = arith.constant 0 : index
    %224 = vector.load %arg3[%c15_105, %c0_106, %c0_107] : memref<30x16x49xf32, #tpu.memory_space<vmem>>, vector<1x16x49xf32>
    %225 = vector.shape_cast %224 : vector<1x16x49xf32> to vector<16x49xf32>
    %226 = arith.subf %223, %225 : vector<16x49xf32>
    %227 = arith.mulf %226, %226 : vector<16x49xf32>
    %228 = arith.addf %221, %227 : vector<16x49xf32>
    %c16 = arith.constant 16 : index
    %c0_108 = arith.constant 0 : index
    %c0_109 = arith.constant 0 : index
    %229 = vector.load %arg2[%c16, %c0_108, %c0_109] : memref<30x16x49xf32, #tpu.memory_space<vmem>>, vector<1x16x49xf32>
    %230 = vector.shape_cast %229 : vector<1x16x49xf32> to vector<16x49xf32>
    %c16_110 = arith.constant 16 : index
    %c0_111 = arith.constant 0 : index
    %c0_112 = arith.constant 0 : index
    %231 = vector.load %arg3[%c16_110, %c0_111, %c0_112] : memref<30x16x49xf32, #tpu.memory_space<vmem>>, vector<1x16x49xf32>
    %232 = vector.shape_cast %231 : vector<1x16x49xf32> to vector<16x49xf32>
    %233 = arith.subf %230, %232 : vector<16x49xf32>
    %234 = arith.mulf %233, %233 : vector<16x49xf32>
    %235 = arith.addf %228, %234 : vector<16x49xf32>
    %c17 = arith.constant 17 : index
    %c0_113 = arith.constant 0 : index
    %c0_114 = arith.constant 0 : index
    %236 = vector.load %arg2[%c17, %c0_113, %c0_114] : memref<30x16x49xf32, #tpu.memory_space<vmem>>, vector<1x16x49xf32>
    %237 = vector.shape_cast %236 : vector<1x16x49xf32> to vector<16x49xf32>
    %c17_115 = arith.constant 17 : index
    %c0_116 = arith.constant 0 : index
    %c0_117 = arith.constant 0 : index
    %238 = vector.load %arg3[%c17_115, %c0_116, %c0_117] : memref<30x16x49xf32, #tpu.memory_space<vmem>>, vector<1x16x49xf32>
    %239 = vector.shape_cast %238 : vector<1x16x49xf32> to vector<16x49xf32>
    %240 = arith.subf %237, %239 : vector<16x49xf32>
    %241 = arith.mulf %240, %240 : vector<16x49xf32>
    %242 = arith.addf %235, %241 : vector<16x49xf32>
    %c18 = arith.constant 18 : index
    %c0_118 = arith.constant 0 : index
    %c0_119 = arith.constant 0 : index
    %243 = vector.load %arg2[%c18, %c0_118, %c0_119] : memref<30x16x49xf32, #tpu.memory_space<vmem>>, vector<1x16x49xf32>
    %244 = vector.shape_cast %243 : vector<1x16x49xf32> to vector<16x49xf32>
    %c18_120 = arith.constant 18 : index
    %c0_121 = arith.constant 0 : index
    %c0_122 = arith.constant 0 : index
    %245 = vector.load %arg3[%c18_120, %c0_121, %c0_122] : memref<30x16x49xf32, #tpu.memory_space<vmem>>, vector<1x16x49xf32>
    %246 = vector.shape_cast %245 : vector<1x16x49xf32> to vector<16x49xf32>
    %247 = arith.subf %244, %246 : vector<16x49xf32>
    %248 = arith.mulf %247, %247 : vector<16x49xf32>
    %249 = arith.addf %242, %248 : vector<16x49xf32>
    %c19 = arith.constant 19 : index
    %c0_123 = arith.constant 0 : index
    %c0_124 = arith.constant 0 : index
    %250 = vector.load %arg2[%c19, %c0_123, %c0_124] : memref<30x16x49xf32, #tpu.memory_space<vmem>>, vector<1x16x49xf32>
    %251 = vector.shape_cast %250 : vector<1x16x49xf32> to vector<16x49xf32>
    %c19_125 = arith.constant 19 : index
    %c0_126 = arith.constant 0 : index
    %c0_127 = arith.constant 0 : index
    %252 = vector.load %arg3[%c19_125, %c0_126, %c0_127] : memref<30x16x49xf32, #tpu.memory_space<vmem>>, vector<1x16x49xf32>
    %253 = vector.shape_cast %252 : vector<1x16x49xf32> to vector<16x49xf32>
    %254 = arith.subf %251, %253 : vector<16x49xf32>
    %255 = arith.mulf %254, %254 : vector<16x49xf32>
    %256 = arith.addf %249, %255 : vector<16x49xf32>
    %c20_128 = arith.constant 20 : index
    %c0_129 = arith.constant 0 : index
    %c0_130 = arith.constant 0 : index
    %257 = vector.load %arg2[%c20_128, %c0_129, %c0_130] : memref<30x16x49xf32, #tpu.memory_space<vmem>>, vector<1x16x49xf32>
    %258 = vector.shape_cast %257 : vector<1x16x49xf32> to vector<16x49xf32>
    %c20_131 = arith.constant 20 : index
    %c0_132 = arith.constant 0 : index
    %c0_133 = arith.constant 0 : index
    %259 = vector.load %arg3[%c20_131, %c0_132, %c0_133] : memref<30x16x49xf32, #tpu.memory_space<vmem>>, vector<1x16x49xf32>
    %260 = vector.shape_cast %259 : vector<1x16x49xf32> to vector<16x49xf32>
    %261 = arith.subf %258, %260 : vector<16x49xf32>
    %262 = arith.mulf %261, %261 : vector<16x49xf32>
    %263 = arith.addf %256, %262 : vector<16x49xf32>
    %c21 = arith.constant 21 : index
    %c0_134 = arith.constant 0 : index
    %c0_135 = arith.constant 0 : index
    %264 = vector.load %arg2[%c21, %c0_134, %c0_135] : memref<30x16x49xf32, #tpu.memory_space<vmem>>, vector<1x16x49xf32>
    %265 = vector.shape_cast %264 : vector<1x16x49xf32> to vector<16x49xf32>
    %c21_136 = arith.constant 21 : index
    %c0_137 = arith.constant 0 : index
    %c0_138 = arith.constant 0 : index
    %266 = vector.load %arg3[%c21_136, %c0_137, %c0_138] : memref<30x16x49xf32, #tpu.memory_space<vmem>>, vector<1x16x49xf32>
    %267 = vector.shape_cast %266 : vector<1x16x49xf32> to vector<16x49xf32>
    %268 = arith.subf %265, %267 : vector<16x49xf32>
    %269 = arith.mulf %268, %268 : vector<16x49xf32>
    %270 = arith.addf %263, %269 : vector<16x49xf32>
    %c22 = arith.constant 22 : index
    %c0_139 = arith.constant 0 : index
    %c0_140 = arith.constant 0 : index
    %271 = vector.load %arg2[%c22, %c0_139, %c0_140] : memref<30x16x49xf32, #tpu.memory_space<vmem>>, vector<1x16x49xf32>
    %272 = vector.shape_cast %271 : vector<1x16x49xf32> to vector<16x49xf32>
    %c22_141 = arith.constant 22 : index
    %c0_142 = arith.constant 0 : index
    %c0_143 = arith.constant 0 : index
    %273 = vector.load %arg3[%c22_141, %c0_142, %c0_143] : memref<30x16x49xf32, #tpu.memory_space<vmem>>, vector<1x16x49xf32>
    %274 = vector.shape_cast %273 : vector<1x16x49xf32> to vector<16x49xf32>
    %275 = arith.subf %272, %274 : vector<16x49xf32>
    %276 = arith.mulf %275, %275 : vector<16x49xf32>
    %277 = arith.addf %270, %276 : vector<16x49xf32>
    %c23 = arith.constant 23 : index
    %c0_144 = arith.constant 0 : index
    %c0_145 = arith.constant 0 : index
    %278 = vector.load %arg2[%c23, %c0_144, %c0_145] : memref<30x16x49xf32, #tpu.memory_space<vmem>>, vector<1x16x49xf32>
    %279 = vector.shape_cast %278 : vector<1x16x49xf32> to vector<16x49xf32>
    %c23_146 = arith.constant 23 : index
    %c0_147 = arith.constant 0 : index
    %c0_148 = arith.constant 0 : index
    %280 = vector.load %arg3[%c23_146, %c0_147, %c0_148] : memref<30x16x49xf32, #tpu.memory_space<vmem>>, vector<1x16x49xf32>
    %281 = vector.shape_cast %280 : vector<1x16x49xf32> to vector<16x49xf32>
    %282 = arith.subf %279, %281 : vector<16x49xf32>
    %283 = arith.mulf %282, %282 : vector<16x49xf32>
    %284 = arith.addf %277, %283 : vector<16x49xf32>
    %c24 = arith.constant 24 : index
    %c0_149 = arith.constant 0 : index
    %c0_150 = arith.constant 0 : index
    %285 = vector.load %arg2[%c24, %c0_149, %c0_150] : memref<30x16x49xf32, #tpu.memory_space<vmem>>, vector<1x16x49xf32>
    %286 = vector.shape_cast %285 : vector<1x16x49xf32> to vector<16x49xf32>
    %c24_151 = arith.constant 24 : index
    %c0_152 = arith.constant 0 : index
    %c0_153 = arith.constant 0 : index
    %287 = vector.load %arg3[%c24_151, %c0_152, %c0_153] : memref<30x16x49xf32, #tpu.memory_space<vmem>>, vector<1x16x49xf32>
    %288 = vector.shape_cast %287 : vector<1x16x49xf32> to vector<16x49xf32>
    %289 = arith.subf %286, %288 : vector<16x49xf32>
    %290 = arith.mulf %289, %289 : vector<16x49xf32>
    %291 = arith.addf %284, %290 : vector<16x49xf32>
    %c25 = arith.constant 25 : index
    %c0_154 = arith.constant 0 : index
    %c0_155 = arith.constant 0 : index
    %292 = vector.load %arg2[%c25, %c0_154, %c0_155] : memref<30x16x49xf32, #tpu.memory_space<vmem>>, vector<1x16x49xf32>
    %293 = vector.shape_cast %292 : vector<1x16x49xf32> to vector<16x49xf32>
    %c25_156 = arith.constant 25 : index
    %c0_157 = arith.constant 0 : index
    %c0_158 = arith.constant 0 : index
    %294 = vector.load %arg3[%c25_156, %c0_157, %c0_158] : memref<30x16x49xf32, #tpu.memory_space<vmem>>, vector<1x16x49xf32>
    %295 = vector.shape_cast %294 : vector<1x16x49xf32> to vector<16x49xf32>
    %296 = arith.subf %293, %295 : vector<16x49xf32>
    %297 = arith.mulf %296, %296 : vector<16x49xf32>
    %298 = arith.addf %291, %297 : vector<16x49xf32>
    %c26 = arith.constant 26 : index
    %c0_159 = arith.constant 0 : index
    %c0_160 = arith.constant 0 : index
    %299 = vector.load %arg2[%c26, %c0_159, %c0_160] : memref<30x16x49xf32, #tpu.memory_space<vmem>>, vector<1x16x49xf32>
    %300 = vector.shape_cast %299 : vector<1x16x49xf32> to vector<16x49xf32>
    %c26_161 = arith.constant 26 : index
    %c0_162 = arith.constant 0 : index
    %c0_163 = arith.constant 0 : index
    %301 = vector.load %arg3[%c26_161, %c0_162, %c0_163] : memref<30x16x49xf32, #tpu.memory_space<vmem>>, vector<1x16x49xf32>
    %302 = vector.shape_cast %301 : vector<1x16x49xf32> to vector<16x49xf32>
    %303 = arith.subf %300, %302 : vector<16x49xf32>
    %304 = arith.mulf %303, %303 : vector<16x49xf32>
    %305 = arith.addf %298, %304 : vector<16x49xf32>
    %c27 = arith.constant 27 : index
    %c0_164 = arith.constant 0 : index
    %c0_165 = arith.constant 0 : index
    %306 = vector.load %arg2[%c27, %c0_164, %c0_165] : memref<30x16x49xf32, #tpu.memory_space<vmem>>, vector<1x16x49xf32>
    %307 = vector.shape_cast %306 : vector<1x16x49xf32> to vector<16x49xf32>
    %c27_166 = arith.constant 27 : index
    %c0_167 = arith.constant 0 : index
    %c0_168 = arith.constant 0 : index
    %308 = vector.load %arg3[%c27_166, %c0_167, %c0_168] : memref<30x16x49xf32, #tpu.memory_space<vmem>>, vector<1x16x49xf32>
    %309 = vector.shape_cast %308 : vector<1x16x49xf32> to vector<16x49xf32>
    %310 = arith.subf %307, %309 : vector<16x49xf32>
    %311 = arith.mulf %310, %310 : vector<16x49xf32>
    %312 = arith.addf %305, %311 : vector<16x49xf32>
    %c28 = arith.constant 28 : index
    %c0_169 = arith.constant 0 : index
    %c0_170 = arith.constant 0 : index
    %313 = vector.load %arg2[%c28, %c0_169, %c0_170] : memref<30x16x49xf32, #tpu.memory_space<vmem>>, vector<1x16x49xf32>
    %314 = vector.shape_cast %313 : vector<1x16x49xf32> to vector<16x49xf32>
    %c28_171 = arith.constant 28 : index
    %c0_172 = arith.constant 0 : index
    %c0_173 = arith.constant 0 : index
    %315 = vector.load %arg3[%c28_171, %c0_172, %c0_173] : memref<30x16x49xf32, #tpu.memory_space<vmem>>, vector<1x16x49xf32>
    %316 = vector.shape_cast %315 : vector<1x16x49xf32> to vector<16x49xf32>
    %317 = arith.subf %314, %316 : vector<16x49xf32>
    %318 = arith.mulf %317, %317 : vector<16x49xf32>
    %319 = arith.addf %312, %318 : vector<16x49xf32>
    %c29 = arith.constant 29 : index
    %c0_174 = arith.constant 0 : index
    %c0_175 = arith.constant 0 : index
    %320 = vector.load %arg2[%c29, %c0_174, %c0_175] : memref<30x16x49xf32, #tpu.memory_space<vmem>>, vector<1x16x49xf32>
    %321 = vector.shape_cast %320 : vector<1x16x49xf32> to vector<16x49xf32>
    %c29_176 = arith.constant 29 : index
    %c0_177 = arith.constant 0 : index
    %c0_178 = arith.constant 0 : index
    %322 = vector.load %arg3[%c29_176, %c0_177, %c0_178] : memref<30x16x49xf32, #tpu.memory_space<vmem>>, vector<1x16x49xf32>
    %323 = vector.shape_cast %322 : vector<1x16x49xf32> to vector<16x49xf32>
    %324 = arith.subf %321, %323 : vector<16x49xf32>
    %325 = arith.mulf %324, %324 : vector<16x49xf32>
    %326 = arith.addf %319, %325 : vector<16x49xf32>
    %cst_179 = arith.constant 0.0510204099 : f32
    %327 = vector.broadcast %cst_179 : f32 to vector<16x49xf32>
    %328 = arith.mulf %327, %151 : vector<16x49xf32>
    %cst_180 = arith.constant 0.0204081628 : f32
    %329 = vector.broadcast %cst_180 : f32 to vector<16x49xf32>
    %330 = arith.mulf %329, %156 : vector<16x49xf32>
    %331 = arith.addf %328, %330 : vector<16x49xf32>
    %cst_181 = arith.constant 7.288630e-04 : f32
    %332 = vector.broadcast %cst_181 : f32 to vector<16x49xf32>
    %333 = arith.mulf %332, %185 : vector<16x49xf32>
    %334 = arith.addf %331, %333 : vector<16x49xf32>
    %335 = arith.mulf %31, %31 : vector<16x49xf32>
    %cst_182 = arith.constant 0.00102040812 : f32
    %336 = vector.broadcast %cst_182 : f32 to vector<16x49xf32>
    %337 = arith.mulf %336, %335 : vector<16x49xf32>
    %338 = arith.mulf %337, %326 : vector<16x49xf32>
    %339 = arith.addf %334, %338 : vector<16x49xf32>
    %cst_183 = arith.constant dense<0.000000e+00> : vector<16xf32>
    %340 = vector.multi_reduction <add>, %339, %cst_183 [1] : vector<16x49xf32> to vector<16xf32>
    %341 = vector.shape_cast %340 : vector<16xf32> to vector<16x1xf32>
    %cst_184 = arith.constant dense<0.000000e+00> : vector<1xf32>
    %342 = vector.multi_reduction <add>, %341, %cst_184 [0] : vector<16x1xf32> to vector<1xf32>
    %343 = vector.shape_cast %342 : vector<1xf32> to vector<1x1xf32>
    %c0_185 = arith.constant 0 : index
    %c0_186 = arith.constant 0 : index
    %c0_187 = arith.constant 0 : index
    %344 = vector.load %arg4[%c0_185, %c0_186, %c0_187] : memref<1x1x1xf32, #tpu.memory_space<vmem>>, vector<1x1x1xf32>
    %345 = vector.shape_cast %344 : vector<1x1x1xf32> to vector<1x1xf32>
    %346 = vector.shape_cast %343 : vector<1x1xf32> to vector<1x1x1xf32>
    tpu.vector_store %arg4[%c0_185, %c0_186, %c0_187], %346 {strides = array<i32>} : memref<1x1x1xf32, #tpu.memory_space<vmem>>, vector<1x1x1xf32>,
    return
  }
  func.func @transform_0(%arg0: i32) -> (i32, i32, i32) {
    %c0_i32 = arith.constant 0 : i32
    %c0_i32_0 = arith.constant 0 : i32
    %c0_i32_1 = arith.constant 0 : i32
    %c0_i32_2 = arith.constant 0 : i32
    return %c0_i32, %c0_i32_0, %c0_i32_1 : i32, i32, i32
  }
  func.func @transform_1(%arg0: i32) -> (i32, i32, i32) {
    %c0_i32 = arith.constant 0 : i32
    %c0_i32_0 = arith.constant 0 : i32
    %c0_i32_1 = arith.constant 0 : i32
    return %c0_i32, %arg0, %c0_i32_0 : i32, i32, i32
  }
  func.func @transform_2(%arg0: i32) -> (i32, i32, i32) {
    %c0_i32 = arith.constant 0 : i32
    %c0_i32_0 = arith.constant 0 : i32
    %c0_i32_1 = arith.constant 0 : i32
    return %c0_i32, %arg0, %c0_i32_0 : i32, i32, i32
  }
  func.func @transform_3(%arg0: i32) -> (i32, i32, i32) {
    %c0_i32 = arith.constant 0 : i32
    %c0_i32_0 = arith.constant 0 : i32
    %c0_i32_1 = arith.constant 0 : i32
    return %arg0, %c0_i32, %c0_i32_0 : i32, i32, i32
  }
}

</mosaic_0001>

<llo_original>
// kernel: yolo_loss.1
$region0: #{yolo_loss.1}
  #allocation0 [shape = 'u32[]', space=smem, size = 0x4, offset = 0x4, fixed_abs, tag = 'smem constant byte address 0x4 - core index']
  #allocation1 [shape = 'u32[144,128]{1,0:T(1,128)}', space=vmem, size = 0x12000, scoped, tag = 'internal scratch']
  %s0 = inlined_call_operand.vmem [shape: f32[2,49,49], index: 0, kind: input, shape index: {}]
  %s1 = inlined_call_operand.vmem [shape: f32[30,32,49], index: 1, kind: input, shape index: {}]
  %s2 = inlined_call_operand.vmem [shape: f32[30,32,49], index: 2, kind: input, shape index: {}]
  %s3 = inlined_call_operand.vmem [shape: f32[2,1,1], index: 3, kind: output, shape index: {}]
  %s4 = sld [smem:[#allocation0]]
  $region121: #{yolo_loss.1} parent=0
    _
  %s6 = ssub.s32 1, %s4
  %s7 = scalar_select 0, %s6, %s4
  $region1: #{yolo_loss.1} parent=0
    #allocation2 [shape = 'u8[491520]{0}', space=vmem, size = 0x78000, scoped, tag = 'input window, operand 1']
    #allocation3 [shape = 'u8[491520]{0}', space=vmem, size = 0x78000, scoped, tag = 'input window, operand 2']
    loop: start=0, step=1, limit=4
    $region2: #{yolo_loss.1} parent=1 // loop_pre_header
      _
    $region3: #{yolo_loss.1} parent=1 // loop_header
      %s9 = sphi 0, %s13
      %p10 = scmp.ge.s32.totalorder %s9, 4
      %s17 = sphi 0, %s17
      %s19 = sphi 0, %s17
      %s20 = sphi 0, %s19
      %s34 = sphi 0, %s20
      %s40 = sphi 0, %s42
      %s43 = sphi 0, %s40
      %s44 = sphi 0, %s43
      %s60 = sphi 0, %s44
      %s66 = sphi 0, %s68
      %s69 = sphi 0, %s66
      %s70 = sphi 0, %s69
      %s86 = sphi 0, %s70
      %s92 = sphi 0, %s94
      %s95 = sphi 0, %s92
      %s96 = sphi 0, %s95
      %s112 = sphi 0, %s96
    $region4: #{yolo_loss.1} parent=1 // loop_header_branch
      %12 = sbr.rel (%p10) target = $region8
    $region5: #{yolo_loss.1} parent=1 // loop_body
      %s14 = ssub.s32 %s9, 1
      %s15 = ssub.s32 %s9, 2
      %s16 = sadd.s32 %s9, 1
      %s18 = sadd.s32 %s17, 1
      %p21 = scmp.eq.s32.totalorder %s9, 1
      %p22 = scmp.ne.s32.totalorder %s17, %s19
      %p23 = scmp.eq.s32.totalorder %s9, 0
      %p24 = por %p22, %p23
      %p25 = scmp.ne.s32.totalorder %s17, %s19
      %p26 = scmp.eq.s32.totalorder %s14, 1
      %p27 = por %p25, %p26
      %p28 = scmp.ne.s32.totalorder %s19, %s20
      %p29 = scmp.eq.s32.totalorder %s14, 0
      %p30 = por %p28, %p29
      %p31 = scmp.ne.s32.totalorder %s19, %s20
      %p32 = scmp.eq.s32.totalorder %s15, 1
      %p33 = por %p31, %p32
      %p35 = scmp.ne.s32.totalorder %s20, %s34
      %p36 = scmp.eq.s32.totalorder %s15, 0
      %p37 = por %p35, %p36
      %s38 = ssub.s32 %s9, %s16
      %p39 = scmp.eq.s32.totalorder %s38, 0
      %s41 = sadd.s32 %s40, 1
      %s42 = scalar_select %p39, %s40, %s41
      %p45 = pneg %p39
      %p46 = scmp.eq.s32.totalorder %s9, 1
      %p47 = por %p45, %p46
      %p48 = scmp.ne.s32.totalorder %s40, %s43
      %p49 = scmp.eq.s32.totalorder %s9, 0
      %p50 = por %p48, %p49
      %p51 = scmp.ne.s32.totalorder %s40, %s43
      %p52 = scmp.eq.s32.totalorder %s14, 1
      %p53 = por %p51, %p52
      %p54 = scmp.ne.s32.totalorder %s43, %s44
      %p55 = scmp.eq.s32.totalorder %s14, 0
      %p56 = por %p54, %p55
      %p57 = scmp.ne.s32.totalorder %s43, %s44
      %p58 = scmp.eq.s32.totalorder %s15, 1
      %p59 = por %p57, %p58
      %p61 = scmp.ne.s32.totalorder %s44, %s60
      %p62 = scmp.eq.s32.totalorder %s15, 0
      %p63 = por %p61, %p62
      %s64 = ssub.s32 %s9, %s16
      %p65 = scmp.eq.s32.totalorder %s64, 0
      %s67 = sadd.s32 %s66, 1
      %s68 = scalar_select %p65, %s66, %s67
      %p71 = pneg %p65
      %p72 = scmp.eq.s32.totalorder %s9, 1
      %p73 = por %p71, %p72
      %p74 = scmp.ne.s32.totalorder %s66, %s69
      %p75 = scmp.eq.s32.totalorder %s9, 0
      %p76 = por %p74, %p75
      %p77 = scmp.ne.s32.totalorder %s66, %s69
      %p78 = scmp.eq.s32.totalorder %s14, 1
      %p79 = por %p77, %p78
      %p80 = scmp.ne.s32.totalorder %s69, %s70
      %p81 = scmp.eq.s32.totalorder %s14, 0
      %p82 = por %p80, %p81
      %p83 = scmp.ne.s32.totalorder %s69, %s70
      %p84 = scmp.eq.s32.totalorder %s15, 1
      %p85 = por %p83, %p84
      %p87 = scmp.ne.s32.totalorder %s70, %s86
      %p88 = scmp.eq.s32.totalorder %s15, 0
      %p89 = por %p87, %p88
      %s90 = ssub.s32 %s9, %s16
      %p91 = scmp.eq.s32.totalorder %s90, 0
      %s93 = sadd.s32 %s92, 1
      %s94 = scalar_select %p91, %s92, %s93
      %p97 = pneg %p91
      %p98 = scmp.eq.s32.totalorder %s9, 1
      %p99 = por %p97, %p98
      %p100 = scmp.ne.s32.totalorder %s92, %s95
      %p101 = scmp.eq.s32.totalorder %s9, 0
      %p102 = por %p100, %p101
      %p103 = scmp.ne.s32.totalorder %s92, %s95
      %p104 = scmp.eq.s32.totalorder %s14, 1
      %p105 = por %p103, %p104
      %p106 = scmp.ne.s32.totalorder %s95, %s96
      %p107 = scmp.eq.s32.totalorder %s14, 0
      %p108 = por %p106, %p107
      %p109 = scmp.ne.s32.totalorder %s95, %s96
      %p110 = scmp.eq.s32.totalorder %s15, 1
      %p111 = por %p109, %p110
      %p113 = scmp.ne.s32.totalorder %s96, %s112
      %p114 = scmp.eq.s32.totalorder %s15, 0
      %p115 = por %p113, %p114
      %p116 = scmp.le.s32.totalorder 1, %s9
      %p117 = scmp.lt.s32.totalorder %s9, 3
      %p118 = pnand %p116, %p117
      %p119 = pneg %p118
      // Predicated region
      $region9: #{yolo_loss.1} parent=5 // pred_check
        _
      $region10: #{yolo_loss.1} parent=5 // pred_check_branch
        %121 = sbr.rel (%p118) target = $region12
      $region11: #{yolo_loss.1} parent=5 // pred_region
        %s122 = ssub.s32 %s9, 1
        // Predicated region
        $region13: #{yolo_loss.1} parent=11 // pred_check
          %p123 = pneg %p30
        $region14: #{yolo_loss.1} parent=11 // pred_check_branch
          %125 = sbr.rel (%p123) target = $region16
        $region15: #{yolo_loss.1} parent=11 // pred_region
          _
        $region16: #{yolo_loss.1} parent=11 // pred_fallthru
          _
      $region12: #{yolo_loss.1} parent=5 // pred_fallthru
        _
      %p126 = scmp.lt.s32.totalorder %s9, 2
      // Predicated region
      $region17: #{yolo_loss.1} parent=5 // pred_check
        %p127 = pneg %p126
      $region18: #{yolo_loss.1} parent=5 // pred_check_branch
        %129 = sbr.rel (%p127) target = $region20
      $region19: #{yolo_loss.1} parent=5 // pred_region
        // Predicated region
        $region21: #{yolo_loss.1} parent=19 // pred_check
          %p130 = pneg %p50
        $region22: #{yolo_loss.1} parent=19 // pred_check_branch
          %132 = sbr.rel (%p130) target = $region24
        $region23: #{yolo_loss.1} parent=19 // pred_region
          %s133 = sand.u32 %s40, 1
          %s134 = sand.u32 %s40, 1
          %s135 = smul.addr %s134, 480
          %s136 = scalar_lea.vmem [#allocation2], %s135
          %s137 = smul.u32 2, %s9
          %s138 = smul.addr %s137, 8
          %s139 = scalar_lea.vmem %s1, %s138
          // Predicated region
          $region25: #{yolo_loss.1} parent=23 // pred_check
            _
          $region26: #{yolo_loss.1} parent=23 // pred_check_branch
            %141 = sbr.rel (0) target = $region28
          $region27: #{yolo_loss.1} parent=23 // pred_region
            // Predicated region
            $region29: #{yolo_loss.1} parent=27 // pred_check
              _
            $region30: #{yolo_loss.1} parent=27 // pred_check_branch
              %143 = sbr.rel (0) target = $region32
            $region31: #{yolo_loss.1} parent=27 // pred_region
              // Predicated region
              $region44: #{yolo_loss.1} parent=31 // pred_check
                _
              $region45: #{yolo_loss.1} parent=31 // pred_check_branch
                %277 = sbr.rel (0) target = $region47
              $region46: #{yolo_loss.1} parent=31 // pred_region
                loop: start=0, step=1, limit=1
                $region48: #{yolo_loss.1} parent=46 // loop_pre_header
                  _
                $region49: #{yolo_loss.1} parent=46 // loop_header
                  %s279 = sphi 0, %s283
                  %p280 = scmp.ge.s32.totalorder %s279, 1
                  %s284 = sphi %s139, %s139
                  %s285 = sphi %s136, %s136
                $region50: #{yolo_loss.1} parent=46 // loop_header_branch
                  %282 = sbr.rel (%p280) target = $region54
                $region51: #{yolo_loss.1} parent=46 // loop_body
                  %v286 = vld [vmem:[%s284] sm:$0xff]
                  %287 = vst [vmem:[%s285] sm:$0xff] %v286
                  %v288 = vld [vmem:[%s284 + $0x8] sm:$0xff]
                  %289 = vst [vmem:[%s285 + $0x8] sm:$0xff] %v288
                  %v290 = vld [vmem:[%s284 + $0x20] sm:$0xff]
                  %291 = vst [vmem:[%s285 + $0x10] sm:$0xff] %v290
                  %v292 = vld [vmem:[%s284 + $0x28] sm:$0xff]
                  %293 = vst [vmem:[%s285 + $0x18] sm:$0xff] %v292
                  %v294 = vld [vmem:[%s284 + $0x40] sm:$0xff]
                  %295 = vst [vmem:[%s285 + $0x20] sm:$0xff] %v294
                  %v296 = vld [vmem:[%s284 + $0x48] sm:$0xff]
                  %297 = vst [vmem:[%s285 + $0x28] sm:$0xff] %v296
                  %v298 = vld [vmem:[%s284 + $0x60] sm:$0xff]
                  %299 = vst [vmem:[%s285 + $0x30] sm:$0xff] %v298
                  %v300 = vld [vmem:[%s284 + $0x68] sm:$0xff]
                  %301 = vst [vmem:[%s285 + $0x38] sm:$0xff] %v300
                  %v302 = vld [vmem:[%s284 + $0x80] sm:$0xff]
                  %303 = vst [vmem:[%s285 + $0x40] sm:$0xff] %v302
                  %v304 = vld [vmem:[%s284 + $0x88] sm:$0xff]
                  %305 = vst [vmem:[%s285 + $0x48] sm:$0xff] %v304
                  %v306 = vld [vmem:[%s284 + $0xa0] sm:$0xff]
                  %307 = vst [vmem:[%s285 + $0x50] sm:$0xff] %v306
                  %v308 = vld [vmem:[%s284 + $0xa8] sm:$0xff]
                  %309 = vst [vmem:[%s285 + $0x58] sm:$0xff] %v308
                  %v310 = vld [vmem:[%s284 + $0xc0] sm:$0xff]
                  %311 = vst [vmem:[%s285 + $0x60] sm:$0xff] %v310
                  %v312 = vld [vmem:[%s284 + $0xc8] sm:$0xff]
                  %313 = vst [vmem:[%s285 + $0x68] sm:$0xff] %v312
                  %v314 = vld [vmem:[%s284 + $0xe0] sm:$0xff]
                  %315 = vst [vmem:[%s285 + $0x70] sm:$0xff] %v314
                  %v316 = vld [vmem:[%s284 + $0xe8] sm:$0xff]
                  %317 = vst [vmem:[%s285 + $0x78] sm:$0xff] %v316
                  %v318 = vld [vmem:[%s284 + $0x100] sm:$0xff]
                  %319 = vst [vmem:[%s285 + $0x80] sm:$0xff] %v318
                  %v320 = vld [vmem:[%s284 + $0x108] sm:$0xff]
                  %321 = vst [vmem:[%s285 + $0x88] sm:$0xff] %v320
                  %v322 = vld [vmem:[%s284 + $0x120] sm:$0xff]
                  %323 = vst [vmem:[%s285 + $0x90] sm:$0xff] %v322
                  %v324 = vld [vmem:[%s284 + $0x128] sm:$0xff]
                  %325 = vst [vmem:[%s285 + $0x98] sm:$0xff] %v324
                  %v326 = vld [vmem:[%s284 + $0x140] sm:$0xff]
                  %327 = vst [vmem:[%s285 + $0xa0] sm:$0xff] %v326
                  %v328 = vld [vmem:[%s284 + $0x148] sm:$0xff]
                  %329 = vst [vmem:[%s285 + $0xa8] sm:$0xff] %v328
                  %v330 = vld [vmem:[%s284 + $0x160] sm:$0xff]
                  %331 = vst [vmem:[%s285 + $0xb0] sm:$0xff] %v330
                  %v332 = vld [vmem:[%s284 + $0x168] sm:$0xff]
                  %333 = vst [vmem:[%s285 + $0xb8] sm:$0xff] %v332
                  %v334 = vld [vmem:[%s284 + $0x180] sm:$0xff]
                  %335 = vst [vmem:[%s285 + $0xc0] sm:$0xff] %v334
                  %v336 = vld [vmem:[%s284 + $0x188] sm:$0xff]
                  %337 = vst [vmem:[%s285 + $0xc8] sm:$0xff] %v336
                  %v338 = vld [vmem:[%s284 + $0x1a0] sm:$0xff]
                  %339 = vst [vmem:[%s285 + $0xd0] sm:$0xff] %v338
                  %v340 = vld [vmem:[%s284 + $0x1a8] sm:$0xff]
                  %341 = vst [vmem:[%s285 + $0xd8] sm:$0xff] %v340
                  %v342 = vld [vmem:[%s284 + $0x1c0] sm:$0xff]
                  %343 = vst [vmem:[%s285 + $0xe0] sm:$0xff] %v342
                  %v344 = vld [vmem:[%s284 + $0x1c8] sm:$0xff]
                  %345 = vst [vmem:[%s285 + $0xe8] sm:$0xff] %v344
                  %v346 = vld [vmem:[%s284 + $0x1e0] sm:$0xff]
                  %347 = vst [vmem:[%s285 + $0xf0] sm:$0xff] %v346
                  %v348 = vld [vmem:[%s284 + $0x1e8] sm:$0xff]
                  %349 = vst [vmem:[%s285 + $0xf8] sm:$0xff] %v348
                  %v350 = vld [vmem:[%s284 + $0x200] sm:$0xff]
                  %351 = vst [vmem:[%s285 + $0x100] sm:$0xff] %v350
                  %v352 = vld [vmem:[%s284 + $0x208] sm:$0xff]
                  %353 = vst [vmem:[%s285 + $0x108] sm:$0xff] %v352
                  %v354 = vld [vmem:[%s284 + $0x220] sm:$0xff]
                  %355 = vst [vmem:[%s285 + $0x110] sm:$0xff] %v354
                  %v356 = vld [vmem:[%s284 + $0x228] sm:$0xff]
                  %357 = vst [vmem:[%s285 + $0x118] sm:$0xff] %v356
                  %v358 = vld [vmem:[%s284 + $0x240] sm:$0xff]
                  %359 = vst [vmem:[%s285 + $0x120] sm:$0xff] %v358
                  %v360 = vld [vmem:[%s284 + $0x248] sm:$0xff]
                  %361 = vst [vmem:[%s285 + $0x128] sm:$0xff] %v360
                  %v362 = vld [vmem:[%s284 + $0x260] sm:$0xff]
                  %363 = vst [vmem:[%s285 + $0x130] sm:$0xff] %v362
                  %v364 = vld [vmem:[%s284 + $0x268] sm:$0xff]
                  %365 = vst [vmem:[%s285 + $0x138] sm:$0xff] %v364
                  %v366 = vld [vmem:[%s284 + $0x280] sm:$0xff]
                  %367 = vst [vmem:[%s285 + $0x140] sm:$0xff] %v366
                  %v368 = vld [vmem:[%s284 + $0x288] sm:$0xff]
                  %369 = vst [vmem:[%s285 + $0x148] sm:$0xff] %v368
                  %v370 = vld [vmem:[%s284 + $0x2a0] sm:$0xff]
                  %371 = vst [vmem:[%s285 + $0x150] sm:$0xff] %v370
                  %v372 = vld [vmem:[%s284 + $0x2a8] sm:$0xff]
                  %373 = vst [vmem:[%s285 + $0x158] sm:$0xff] %v372
                  %v374 = vld [vmem:[%s284 + $0x2c0] sm:$0xff]
                  %375 = vst [vmem:[%s285 + $0x160] sm:$0xff] %v374
                  %v376 = vld [vmem:[%s284 + $0x2c8] sm:$0xff]
                  %377 = vst [vmem:[%s285 + $0x168] sm:$0xff] %v376
                  %v378 = vld [vmem:[%s284 + $0x2e0] sm:$0xff]
                  %379 = vst [vmem:[%s285 + $0x170] sm:$0xff] %v378
                  %v380 = vld [vmem:[%s284 + $0x2e8] sm:$0xff]
                  %381 = vst [vmem:[%s285 + $0x178] sm:$0xff] %v380
                  %v382 = vld [vmem:[%s284 + $0x300] sm:$0xff]
                  %383 = vst [vmem:[%s285 + $0x180] sm:$0xff] %v382
                  %v384 = vld [vmem:[%s284 + $0x308] sm:$0xff]
                  %385 = vst [vmem:[%s285 + $0x188] sm:$0xff] %v384
                  %v386 = vld [vmem:[%s284 + $0x320] sm:$0xff]
                  %387 = vst [vmem:[%s285 + $0x190] sm:$0xff] %v386
                  %v388 = vld [vmem:[%s284 + $0x328] sm:$0xff]
                  %389 = vst [vmem:[%s285 + $0x198] sm:$0xff] %v388
                  %v390 = vld [vmem:[%s284 + $0x340] sm:$0xff]
                  %391 = vst [vmem:[%s285 + $0x1a0] sm:$0xff] %v390
                  %v392 = vld [vmem:[%s284 + $0x348] sm:$0xff]
                  %393 = vst [vmem:[%s285 + $0x1a8] sm:$0xff] %v392
                  %v394 = vld [vmem:[%s284 + $0x360] sm:$0xff]
                  %395 = vst [vmem:[%s285 + $0x1b0] sm:$0xff] %v394
                  %v396 = vld [vmem:[%s284 + $0x368] sm:$0xff]
                  %397 = vst [vmem:[%s285 + $0x1b8] sm:$0xff] %v396
                  %v398 = vld [vmem:[%s284 + $0x380] sm:$0xff]
                  %399 = vst [vmem:[%s285 + $0x1c0] sm:$0xff] %v398
                  %v400 = vld [vmem:[%s284 + $0x388] sm:$0xff]
                  %401 = vst [vmem:[%s285 + $0x1c8] sm:$0xff] %v400
                  %v402 = vld [vmem:[%s284 + $0x3a0] sm:$0xff]
                  %403 = vst [vmem:[%s285 + $0x1d0] sm:$0xff] %v402
                  %v404 = vld [vmem:[%s284 + $0x3a8] sm:$0xff]
                  %405 = vst [vmem:[%s285 + $0x1d8] sm:$0xff] %v404
                $region52: #{yolo_loss.1} parent=46 // loop_footer
                  %s283 = sadd.s32 1, %s279
                $region53: #{yolo_loss.1} parent=46 // loop_footer_branch
                  %278 = sbr.rel target = $region49
                $region54: #{yolo_loss.1} parent=46 // loop_exit
                  _
              $region47: #{yolo_loss.1} parent=31 // pred_fallthru
                _
              // Predicated region
              $region55: #{yolo_loss.1} parent=31 // pred_check
                _
              $region56: #{yolo_loss.1} parent=31 // pred_check_branch
                %407 = sbr.rel target = $region58
              $region57: #{yolo_loss.1} parent=31 // pred_region
                _
              $region58: #{yolo_loss.1} parent=31 // pred_fallthru
                _
            $region32: #{yolo_loss.1} parent=27 // pred_fallthru
              _
            // Predicated region
            $region33: #{yolo_loss.1} parent=27 // pred_check
              _
            $region34: #{yolo_loss.1} parent=27 // pred_check_branch
              %145 = sbr.rel target = $region36
            $region35: #{yolo_loss.1} parent=27 // pred_region
              %s147 = ssub.s32 256, 1
              loop: start=0, step=1, limit=1
              $region37: #{yolo_loss.1} parent=35 // loop_pre_header
                _
              $region38: #{yolo_loss.1} parent=35 // loop_header
                %s149 = sphi 0, %s153
                %p150 = scmp.ge.s32.totalorder %s149, 1
                %s154 = sphi %s139, %s139
                %s155 = sphi %s136, %s136
              $region39: #{yolo_loss.1} parent=35 // loop_header_branch
                %152 = sbr.rel (%p150) target = $region43
              $region40: #{yolo_loss.1} parent=35 // loop_body
                %v156 = vld [vmem:[%s154] sm:%s147]
                %157 = vst [vmem:[%s155] sm:%s147] %v156
                %v158 = vld [vmem:[%s154 + $0x8] sm:%s147]
                %159 = vst [vmem:[%s155 + $0x8] sm:%s147] %v158
                %v160 = vld [vmem:[%s154 + $0x20] sm:%s147]
                %161 = vst [vmem:[%s155 + $0x10] sm:%s147] %v160
                %v162 = vld [vmem:[%s154 + $0x28] sm:%s147]
                %163 = vst [vmem:[%s155 + $0x18] sm:%s147] %v162
                %v164 = vld [vmem:[%s154 + $0x40] sm:%s147]
                %165 = vst [vmem:[%s155 + $0x20] sm:%s147] %v164
                %v166 = vld [vmem:[%s154 + $0x48] sm:%s147]
                %167 = vst [vmem:[%s155 + $0x28] sm:%s147] %v166
                %v168 = vld [vmem:[%s154 + $0x60] sm:%s147]
                %169 = vst [vmem:[%s155 + $0x30] sm:%s147] %v168
                %v170 = vld [vmem:[%s154 + $0x68] sm:%s147]
                %171 = vst [vmem:[%s155 + $0x38] sm:%s147] %v170
                %v172 = vld [vmem:[%s154 + $0x80] sm:%s147]
                %173 = vst [vmem:[%s155 + $0x40] sm:%s147] %v172
                %v174 = vld [vmem:[%s154 + $0x88] sm:%s147]
                %175 = vst [vmem:[%s155 + $0x48] sm:%s147] %v174
                %v176 = vld [vmem:[%s154 + $0xa0] sm:%s147]
                %177 = vst [vmem:[%s155 + $0x50] sm:%s147] %v176
                %v178 = vld [vmem:[%s154 + $0xa8] sm:%s147]
                %179 = vst [vmem:[%s155 + $0x58] sm:%s147] %v178
                %v180 = vld [vmem:[%s154 + $0xc0] sm:%s147]
                %181 = vst [vmem:[%s155 + $0x60] sm:%s147] %v180
                %v182 = vld [vmem:[%s154 + $0xc8] sm:%s147]
                %183 = vst [vmem:[%s155 + $0x68] sm:%s147] %v182
                %v184 = vld [vmem:[%s154 + $0xe0] sm:%s147]
                %185 = vst [vmem:[%s155 + $0x70] sm:%s147] %v184
                %v186 = vld [vmem:[%s154 + $0xe8] sm:%s147]
                %187 = vst [vmem:[%s155 + $0x78] sm:%s147] %v186
                %v188 = vld [vmem:[%s154 + $0x100] sm:%s147]
                %189 = vst [vmem:[%s155 + $0x80] sm:%s147] %v188
                %v190 = vld [vmem:[%s154 + $0x108] sm:%s147]
                %191 = vst [vmem:[%s155 + $0x88] sm:%s147] %v190
                %v192 = vld [vmem:[%s154 + $0x120] sm:%s147]
                %193 = vst [vmem:[%s155 + $0x90] sm:%s147] %v192
                %v194 = vld [vmem:[%s154 + $0x128] sm:%s147]
                %195 = vst [vmem:[%s155 + $0x98] sm:%s147] %v194
                %v196 = vld [vmem:[%s154 + $0x140] sm:%s147]
                %197 = vst [vmem:[%s155 + $0xa0] sm:%s147] %v196
                %v198 = vld [vmem:[%s154 + $0x148] sm:%s147]
                %199 = vst [vmem:[%s155 + $0xa8] sm:%s147] %v198
                %v200 = vld [vmem:[%s154 + $0x160] sm:%s147]
                %201 = vst [vmem:[%s155 + $0xb0] sm:%s147] %v200
                %v202 = vld [vmem:[%s154 + $0x168] sm:%s147]
                %203 = vst [vmem:[%s155 + $0xb8] sm:%s147] %v202
                %v204 = vld [vmem:[%s154 + $0x180] sm:%s147]
                %205 = vst [vmem:[%s155 + $0xc0] sm:%s147] %v204
                %v206 = vld [vmem:[%s154 + $0x188] sm:%s147]
                %207 = vst [vmem:[%s155 + $0xc8] sm:%s147] %v206
                %v208 = vld [vmem:[%s154 + $0x1a0] sm:%s147]
                %209 = vst [vmem:[%s155 + $0xd0] sm:%s147] %v208
                %v210 = vld [vmem:[%s154 + $0x1a8] sm:%s147]
                %211 = vst [vmem:[%s155 + $0xd8] sm:%s147] %v210
                %v212 = vld [vmem:[%s154 + $0x1c0] sm:%s147]
                %213 = vst [vmem:[%s155 + $0xe0] sm:%s147] %v212
                %v214 = vld [vmem:[%s154 + $0x1c8] sm:%s147]
                %215 = vst [vmem:[%s155 + $0xe8] sm:%s147] %v214
                %v216 = vld [vmem:[%s154 + $0x1e0] sm:%s147]
                %217 = vst [vmem:[%s155 + $0xf0] sm:%s147] %v216
                %v218 = vld [vmem:[%s154 + $0x1e8] sm:%s147]
                %219 = vst [vmem:[%s155 + $0xf8] sm:%s147] %v218
                %v220 = vld [vmem:[%s154 + $0x200] sm:%s147]
                %221 = vst [vmem:[%s155 + $0x100] sm:%s147] %v220
                %v222 = vld [vmem:[%s154 + $0x208] sm:%s147]
                %223 = vst [vmem:[%s155 + $0x108] sm:%s147] %v222
                %v224 = vld [vmem:[%s154 + $0x220] sm:%s147]
                %225 = vst [vmem:[%s155 + $0x110] sm:%s147] %v224
                %v226 = vld [vmem:[%s154 + $0x228] sm:%s147]
                %227 = vst [vmem:[%s155 + $0x118] sm:%s147] %v226
                %v228 = vld [vmem:[%s154 + $0x240] sm:%s147]
                %229 = vst [vmem:[%s155 + $0x120] sm:%s147] %v228
                %v230 = vld [vmem:[%s154 + $0x248] sm:%s147]
                %231 = vst [vmem:[%s155 + $0x128] sm:%s147] %v230
                %v232 = vld [vmem:[%s154 + $0x260] sm:%s147]
                %233 = vst [vmem:[%s155 + $0x130] sm:%s147] %v232
                %v234 = vld [vmem:[%s154 + $0x268] sm:%s147]
                %235 = vst [vmem:[%s155 + $0x138] sm:%s147] %v234
                %v236 = vld [vmem:[%s154 + $0x280] sm:%s147]
                %237 = vst [vmem:[%s155 + $0x140] sm:%s147] %v236
                %v238 = vld [vmem:[%s154 + $0x288] sm:%s147]
                %239 = vst [vmem:[%s155 + $0x148] sm:%s147] %v238
                %v240 = vld [vmem:[%s154 + $0x2a0] sm:%s147]
                %241 = vst [vmem:[%s155 + $0x150] sm:%s147] %v240
                %v242 = vld [vmem:[%s154 + $0x2a8] sm:%s147]
                %243 = vst [vmem:[%s155 + $0x158] sm:%s147] %v242
                %v244 = vld [vmem:[%s154 + $0x2c0] sm:%s147]
                %245 = vst [vmem:[%s155 + $0x160] sm:%s147] %v244
                %v246 = vld [vmem:[%s154 + $0x2c8] sm:%s147]
                %247 = vst [vmem:[%s155 + $0x168] sm:%s147] %v246
                %v248 = vld [vmem:[%s154 + $0x2e0] sm:%s147]
                %249 = vst [vmem:[%s155 + $0x170] sm:%s147] %v248
                %v250 = vld [vmem:[%s154 + $0x2e8] sm:%s147]
                %251 = vst [vmem:[%s155 + $0x178] sm:%s147] %v250
                %v252 = vld [vmem:[%s154 + $0x300] sm:%s147]
                %253 = vst [vmem:[%s155 + $0x180] sm:%s147] %v252
                %v254 = vld [vmem:[%s154 + $0x308] sm:%s147]
                %255 = vst [vmem:[%s155 + $0x188] sm:%s147] %v254
                %v256 = vld [vmem:[%s154 + $0x320] sm:%s147]
                %257 = vst [vmem:[%s155 + $0x190] sm:%s147] %v256
                %v258 = vld [vmem:[%s154 + $0x328] sm:%s147]
                %259 = vst [vmem:[%s155 + $0x198] sm:%s147] %v258
                %v260 = vld [vmem:[%s154 + $0x340] sm:%s147]
                %261 = vst [vmem:[%s155 + $0x1a0] sm:%s147] %v260
                %v262 = vld [vmem:[%s154 + $0x348] sm:%s147]
                %263 = vst [vmem:[%s155 + $0x1a8] sm:%s147] %v262
                %v264 = vld [vmem:[%s154 + $0x360] sm:%s147]
                %265 = vst [vmem:[%s155 + $0x1b0] sm:%s147] %v264
                %v266 = vld [vmem:[%s154 + $0x368] sm:%s147]
                %267 = vst [vmem:[%s155 + $0x1b8] sm:%s147] %v266
                %v268 = vld [vmem:[%s154 + $0x380] sm:%s147]
                %269 = vst [vmem:[%s155 + $0x1c0] sm:%s147] %v268
                %v270 = vld [vmem:[%s154 + $0x388] sm:%s147]
                %271 = vst [vmem:[%s155 + $0x1c8] sm:%s147] %v270
                %v272 = vld [vmem:[%s154 + $0x3a0] sm:%s147]
                %273 = vst [vmem:[%s155 + $0x1d0] sm:%s147] %v272
                %v274 = vld [vmem:[%s154 + $0x3a8] sm:%s147]
                %275 = vst [vmem:[%s155 + $0x1d8] sm:%s147] %v274
              $region41: #{yolo_loss.1} parent=35 // loop_footer
                %s153 = sadd.s32 1, %s149
              $region42: #{yolo_loss.1} parent=35 // loop_footer_branch
                %148 = sbr.rel target = $region38
              $region43: #{yolo_loss.1} parent=35 // loop_exit
                _
            $region36: #{yolo_loss.1} parent=27 // pred_fallthru
              _
          $region28: #{yolo_loss.1} parent=23 // pred_fallthru
            _
          %408 = vnop
        $region24: #{yolo_loss.1} parent=19 // pred_fallthru
          _
        // Predicated region
        $region59: #{yolo_loss.1} parent=19 // pred_check
          %p409 = pneg %p76
        $region60: #{yolo_loss.1} parent=19 // pred_check_branch
          %411 = sbr.rel (%p409) target = $region62
        $region61: #{yolo_loss.1} parent=19 // pred_region
          %s412 = sand.u32 %s66, 1
          %s413 = sand.u32 %s66, 1
          %s414 = smul.addr %s413, 480
          %s415 = scalar_lea.vmem [#allocation3], %s414
          %s416 = smul.u32 2, %s9
          %s417 = smul.addr %s416, 8
          %s418 = scalar_lea.vmem %s2, %s417
          // Predicated region
          $region63: #{yolo_loss.1} parent=61 // pred_check
            _
          $region64: #{yolo_loss.1} parent=61 // pred_check_branch
            %420 = sbr.rel (0) target = $region66
          $region65: #{yolo_loss.1} parent=61 // pred_region
            // Predicated region
            $region67: #{yolo_loss.1} parent=65 // pred_check
              _
            $region68: #{yolo_loss.1} parent=65 // pred_check_branch
              %422 = sbr.rel (0) target = $region70
            $region69: #{yolo_loss.1} parent=65 // pred_region
              // Predicated region
              $region82: #{yolo_loss.1} parent=69 // pred_check
                _
              $region83: #{yolo_loss.1} parent=69 // pred_check_branch
                %556 = sbr.rel (0) target = $region85
              $region84: #{yolo_loss.1} parent=69 // pred_region
                loop: start=0, step=1, limit=1
                $region86: #{yolo_loss.1} parent=84 // loop_pre_header
                  _
                $region87: #{yolo_loss.1} parent=84 // loop_header
                  %s558 = sphi 0, %s562
                  %p559 = scmp.ge.s32.totalorder %s558, 1
                  %s563 = sphi %s418, %s418
                  %s564 = sphi %s415, %s415
                $region88: #{yolo_loss.1} parent=84 // loop_header_branch
                  %561 = sbr.rel (%p559) target = $region92
                $region89: #{yolo_loss.1} parent=84 // loop_body
                  %v565 = vld [vmem:[%s563] sm:$0xff]
                  %566 = vst [vmem:[%s564] sm:$0xff] %v565
                  %v567 = vld [vmem:[%s563 + $0x8] sm:$0xff]
                  %568 = vst [vmem:[%s564 + $0x8] sm:$0xff] %v567
                  %v569 = vld [vmem:[%s563 + $0x20] sm:$0xff]
                  %570 = vst [vmem:[%s564 + $0x10] sm:$0xff] %v569
                  %v571 = vld [vmem:[%s563 + $0x28] sm:$0xff]
                  %572 = vst [vmem:[%s564 + $0x18] sm:$0xff] %v571
                  %v573 = vld [vmem:[%s563 + $0x40] sm:$0xff]
                  %574 = vst [vmem:[%s564 + $0x20] sm:$0xff] %v573
                  %v575 = vld [vmem:[%s563 + $0x48] sm:$0xff]
                  %576 = vst [vmem:[%s564 + $0x28] sm:$0xff] %v575
                  %v577 = vld [vmem:[%s563 + $0x60] sm:$0xff]
                  %578 = vst [vmem:[%s564 + $0x30] sm:$0xff] %v577
                  %v579 = vld [vmem:[%s563 + $0x68] sm:$0xff]
                  %580 = vst [vmem:[%s564 + $0x38] sm:$0xff] %v579
                  %v581 = vld [vmem:[%s563 + $0x80] sm:$0xff]
                  %582 = vst [vmem:[%s564 + $0x40] sm:$0xff] %v581
                  %v583 = vld [vmem:[%s563 + $0x88] sm:$0xff]
                  %584 = vst [vmem:[%s564 + $0x48] sm:$0xff] %v583
                  %v585 = vld [vmem:[%s563 + $0xa0] sm:$0xff]
                  %586 = vst [vmem:[%s564 + $0x50] sm:$0xff] %v585
                  %v587 = vld [vmem:[%s563 + $0xa8] sm:$0xff]
                  %588 = vst [vmem:[%s564 + $0x58] sm:$0xff] %v587
                  %v589 = vld [vmem:[%s563 + $0xc0] sm:$0xff]
                  %590 = vst [vmem:[%s564 + $0x60] sm:$0xff] %v589
                  %v591 = vld [vmem:[%s563 + $0xc8] sm:$0xff]
                  %592 = vst [vmem:[%s564 + $0x68] sm:$0xff] %v591
                  %v593 = vld [vmem:[%s563 + $0xe0] sm:$0xff]
                  %594 = vst [vmem:[%s564 + $0x70] sm:$0xff] %v593
                  %v595 = vld [vmem:[%s563 + $0xe8] sm:$0xff]
                  %596 = vst [vmem:[%s564 + $0x78] sm:$0xff] %v595
                  %v597 = vld [vmem:[%s563 + $0x100] sm:$0xff]
                  %598 = vst [vmem:[%s564 + $0x80] sm:$0xff] %v597
                  %v599 = vld [vmem:[%s563 + $0x108] sm:$0xff]
                  %600 = vst [vmem:[%s564 + $0x88] sm:$0xff] %v599
                  %v601 = vld [vmem:[%s563 + $0x120] sm:$0xff]
                  %602 = vst [vmem:[%s564 + $0x90] sm:$0xff] %v601
                  %v603 = vld [vmem:[%s563 + $0x128] sm:$0xff]
                  %604 = vst [vmem:[%s564 + $0x98] sm:$0xff] %v603
                  %v605 = vld [vmem:[%s563 + $0x140] sm:$0xff]
                  %606 = vst [vmem:[%s564 + $0xa0] sm:$0xff] %v605
                  %v607 = vld [vmem:[%s563 + $0x148] sm:$0xff]
                  %608 = vst [vmem:[%s564 + $0xa8] sm:$0xff] %v607
                  %v609 = vld [vmem:[%s563 + $0x160] sm:$0xff]
                  %610 = vst [vmem:[%s564 + $0xb0] sm:$0xff] %v609
                  %v611 = vld [vmem:[%s563 + $0x168] sm:$0xff]
                  %612 = vst [vmem:[%s564 + $0xb8] sm:$0xff] %v611
                  %v613 = vld [vmem:[%s563 + $0x180] sm:$0xff]
                  %614 = vst [vmem:[%s564 + $0xc0] sm:$0xff] %v613
                  %v615 = vld [vmem:[%s563 + $0x188] sm:$0xff]
                  %616 = vst [vmem:[%s564 + $0xc8] sm:$0xff] %v615
                  %v617 = vld [vmem:[%s563 + $0x1a0] sm:$0xff]
                  %618 = vst [vmem:[%s564 + $0xd0] sm:$0xff] %v617
                  %v619 = vld [vmem:[%s563 + $0x1a8] sm:$0xff]
                  %620 = vst [vmem:[%s564 + $0xd8] sm:$0xff] %v619
                  %v621 = vld [vmem:[%s563 + $0x1c0] sm:$0xff]
                  %622 = vst [vmem:[%s564 + $0xe0] sm:$0xff] %v621
                  %v623 = vld [vmem:[%s563 + $0x1c8] sm:$0xff]
                  %624 = vst [vmem:[%s564 + $0xe8] sm:$0xff] %v623
                  %v625 = vld [vmem:[%s563 + $0x1e0] sm:$0xff]
                  %626 = vst [vmem:[%s564 + $0xf0] sm:$0xff] %v625
                  %v627 = vld [vmem:[%s563 + $0x1e8] sm:$0xff]
                  %628 = vst [vmem:[%s564 + $0xf8] sm:$0xff] %v627
                  %v629 = vld [vmem:[%s563 + $0x200] sm:$0xff]
                  %630 = vst [vmem:[%s564 + $0x100] sm:$0xff] %v629
                  %v631 = vld [vmem:[%s563 + $0x208] sm:$0xff]
                  %632 = vst [vmem:[%s564 + $0x108] sm:$0xff] %v631
                  %v633 = vld [vmem:[%s563 + $0x220] sm:$0xff]
                  %634 = vst [vmem:[%s564 + $0x110] sm:$0xff] %v633
                  %v635 = vld [vmem:[%s563 + $0x228] sm:$0xff]
                  %636 = vst [vmem:[%s564 + $0x118] sm:$0xff] %v635
                  %v637 = vld [vmem:[%s563 + $0x240] sm:$0xff]
                  %638 = vst [vmem:[%s564 + $0x120] sm:$0xff] %v637
                  %v639 = vld [vmem:[%s563 + $0x248] sm:$0xff]
                  %640 = vst [vmem:[%s564 + $0x128] sm:$0xff] %v639
                  %v641 = vld [vmem:[%s563 + $0x260] sm:$0xff]
                  %642 = vst [vmem:[%s564 + $0x130] sm:$0xff] %v641
                  %v643 = vld [vmem:[%s563 + $0x268] sm:$0xff]
                  %644 = vst [vmem:[%s564 + $0x138] sm:$0xff] %v643
                  %v645 = vld [vmem:[%s563 + $0x280] sm:$0xff]
                  %646 = vst [vmem:[%s564 + $0x140] sm:$0xff] %v645
                  %v647 = vld [vmem:[%s563 + $0x288] sm:$0xff]
                  %648 = vst [vmem:[%s564 + $0x148] sm:$0xff] %v647
                  %v649 = vld [vmem:[%s563 + $0x2a0] sm:$0xff]
                  %650 = vst [vmem:[%s564 + $0x150] sm:$0xff] %v649
                  %v651 = vld [vmem:[%s563 + $0x2a8] sm:$0xff]
                  %652 = vst [vmem:[%s564 + $0x158] sm:$0xff] %v651
                  %v653 = vld [vmem:[%s563 + $0x2c0] sm:$0xff]
                  %654 = vst [vmem:[%s564 + $0x160] sm:$0xff] %v653
                  %v655 = vld [vmem:[%s563 + $0x2c8] sm:$0xff]
                  %656 = vst [vmem:[%s564 + $0x168] sm:$0xff] %v655
                  %v657 = vld [vmem:[%s563 + $0x2e0] sm:$0xff]
                  %658 = vst [vmem:[%s564 + $0x170] sm:$0xff] %v657
                  %v659 = vld [vmem:[%s563 + $0x2e8] sm:$0xff]
                  %660 = vst [vmem:[%s564 + $0x178] sm:$0xff] %v659
                  %v661 = vld [vmem:[%s563 + $0x300] sm:$0xff]
                  %662 = vst [vmem:[%s564 + $0x180] sm:$0xff] %v661
                  %v663 = vld [vmem:[%s563 + $0x308] sm:$0xff]
                  %664 = vst [vmem:[%s564 + $0x188] sm:$0xff] %v663
                  %v665 = vld [vmem:[%s563 + $0x320] sm:$0xff]
                  %666 = vst [vmem:[%s564 + $0x190] sm:$0xff] %v665
                  %v667 = vld [vmem:[%s563 + $0x328] sm:$0xff]
                  %668 = vst [vmem:[%s564 + $0x198] sm:$0xff] %v667
                  %v669 = vld [vmem:[%s563 + $0x340] sm:$0xff]
                  %670 = vst [vmem:[%s564 + $0x1a0] sm:$0xff] %v669
                  %v671 = vld [vmem:[%s563 + $0x348] sm:$0xff]
                  %672 = vst [vmem:[%s564 + $0x1a8] sm:$0xff] %v671
                  %v673 = vld [vmem:[%s563 + $0x360] sm:$0xff]
                  %674 = vst [vmem:[%s564 + $0x1b0] sm:$0xff] %v673
                  %v675 = vld [vmem:[%s563 + $0x368] sm:$0xff]
                  %676 = vst [vmem:[%s564 + $0x1b8] sm:$0xff] %v675
                  %v677 = vld [vmem:[%s563 + $0x380] sm:$0xff]
                  %678 = vst [vmem:[%s564 + $0x1c0] sm:$0xff] %v677
                  %v679 = vld [vmem:[%s563 + $0x388] sm:$0xff]
                  %680 = vst [vmem:[%s564 + $0x1c8] sm:$0xff] %v679
                  %v681 = vld [vmem:[%s563 + $0x3a0] sm:$0xff]
                  %682 = vst [vmem:[%s564 + $0x1d0] sm:$0xff] %v681
                  %v683 = vld [vmem:[%s563 + $0x3a8] sm:$0xff]
                  %684 = vst [vmem:[%s564 + $0x1d8] sm:$0xff] %v683
                $region90: #{yolo_loss.1} parent=84 // loop_footer
                  %s562 = sadd.s32 1, %s558
                $region91: #{yolo_loss.1} parent=84 // loop_footer_branch
                  %557 = sbr.rel target = $region87
                $region92: #{yolo_loss.1} parent=84 // loop_exit
                  _
              $region85: #{yolo_loss.1} parent=69 // pred_fallthru
                _
              // Predicated region
              $region93: #{yolo_loss.1} parent=69 // pred_check
                _
              $region94: #{yolo_loss.1} parent=69 // pred_check_branch
                %686 = sbr.rel target = $region96
              $region95: #{yolo_loss.1} parent=69 // pred_region
                _
              $region96: #{yolo_loss.1} parent=69 // pred_fallthru
                _
            $region70: #{yolo_loss.1} parent=65 // pred_fallthru
              _
            // Predicated region
            $region71: #{yolo_loss.1} parent=65 // pred_check
              _
            $region72: #{yolo_loss.1} parent=65 // pred_check_branch
              %424 = sbr.rel target = $region74
            $region73: #{yolo_loss.1} parent=65 // pred_region
              %s426 = ssub.s32 256, 1
              loop: start=0, step=1, limit=1
              $region75: #{yolo_loss.1} parent=73 // loop_pre_header
                _
              $region76: #{yolo_loss.1} parent=73 // loop_header
                %s428 = sphi 0, %s432
                %p429 = scmp.ge.s32.totalorder %s428, 1
                %s433 = sphi %s418, %s418
                %s434 = sphi %s415, %s415
              $region77: #{yolo_loss.1} parent=73 // loop_header_branch
                %431 = sbr.rel (%p429) target = $region81
              $region78: #{yolo_loss.1} parent=73 // loop_body
                %v435 = vld [vmem:[%s433] sm:%s426]
                %436 = vst [vmem:[%s434] sm:%s426] %v435
                %v437 = vld [vmem:[%s433 + $0x8] sm:%s426]
                %438 = vst [vmem:[%s434 + $0x8] sm:%s426] %v437
                %v439 = vld [vmem:[%s433 + $0x20] sm:%s426]
                %440 = vst [vmem:[%s434 + $0x10] sm:%s426] %v439
                %v441 = vld [vmem:[%s433 + $0x28] sm:%s426]
                %442 = vst [vmem:[%s434 + $0x18] sm:%s426] %v441
                %v443 = vld [vmem:[%s433 + $0x40] sm:%s426]
                %444 = vst [vmem:[%s434 + $0x20] sm:%s426] %v443
                %v445 = vld [vmem:[%s433 + $0x48] sm:%s426]
                %446 = vst [vmem:[%s434 + $0x28] sm:%s426] %v445
                %v447 = vld [vmem:[%s433 + $0x60] sm:%s426]
                %448 = vst [vmem:[%s434 + $0x30] sm:%s426] %v447
                %v449 = vld [vmem:[%s433 + $0x68] sm:%s426]
                %450 = vst [vmem:[%s434 + $0x38] sm:%s426] %v449
                %v451 = vld [vmem:[%s433 + $0x80] sm:%s426]
                %452 = vst [vmem:[%s434 + $0x40] sm:%s426] %v451
                %v453 = vld [vmem:[%s433 + $0x88] sm:%s426]
                %454 = vst [vmem:[%s434 + $0x48] sm:%s426] %v453
                %v455 = vld [vmem:[%s433 + $0xa0] sm:%s426]
                %456 = vst [vmem:[%s434 + $0x50] sm:%s426] %v455
                %v457 = vld [vmem:[%s433 + $0xa8] sm:%s426]
                %458 = vst [vmem:[%s434 + $0x58] sm:%s426] %v457
                %v459 = vld [vmem:[%s433 + $0xc0] sm:%s426]
                %460 = vst [vmem:[%s434 + $0x60] sm:%s426] %v459
                %v461 = vld [vmem:[%s433 + $0xc8] sm:%s426]
                %462 = vst [vmem:[%s434 + $0x68] sm:%s426] %v461
                %v463 = vld [vmem:[%s433 + $0xe0] sm:%s426]
                %464 = vst [vmem:[%s434 + $0x70] sm:%s426] %v463
                %v465 = vld [vmem:[%s433 + $0xe8] sm:%s426]
                %466 = vst [vmem:[%s434 + $0x78] sm:%s426] %v465
                %v467 = vld [vmem:[%s433 + $0x100] sm:%s426]
                %468 = vst [vmem:[%s434 + $0x80] sm:%s426] %v467
                %v469 = vld [vmem:[%s433 + $0x108] sm:%s426]
                %470 = vst [vmem:[%s434 + $0x88] sm:%s426] %v469
                %v471 = vld [vmem:[%s433 + $0x120] sm:%s426]
                %472 = vst [vmem:[%s434 + $0x90] sm:%s426] %v471
                %v473 = vld [vmem:[%s433 + $0x128] sm:%s426]
                %474 = vst [vmem:[%s434 + $0x98] sm:%s426] %v473
                %v475 = vld [vmem:[%s433 + $0x140] sm:%s426]
                %476 = vst [vmem:[%s434 + $0xa0] sm:%s426] %v475
                %v477 = vld [vmem:[%s433 + $0x148] sm:%s426]
                %478 = vst [vmem:[%s434 + $0xa8] sm:%s426] %v477
                %v479 = vld [vmem:[%s433 + $0x160] sm:%s426]
                %480 = vst [vmem:[%s434 + $0xb0] sm:%s426] %v479
                %v481 = vld [vmem:[%s433 + $0x168] sm:%s426]
                %482 = vst [vmem:[%s434 + $0xb8] sm:%s426] %v481
                %v483 = vld [vmem:[%s433 + $0x180] sm:%s426]
                %484 = vst [vmem:[%s434 + $0xc0] sm:%s426] %v483
                %v485 = vld [vmem:[%s433 + $0x188] sm:%s426]
                %486 = vst [vmem:[%s434 + $0xc8] sm:%s426] %v485
                %v487 = vld [vmem:[%s433 + $0x1a0] sm:%s426]
                %488 = vst [vmem:[%s434 + $0xd0] sm:%s426] %v487
                %v489 = vld [vmem:[%s433 + $0x1a8] sm:%s426]
                %490 = vst [vmem:[%s434 + $0xd8] sm:%s426] %v489
                %v491 = vld [vmem:[%s433 + $0x1c0] sm:%s426]
                %492 = vst [vmem:[%s434 + $0xe0] sm:%s426] %v491
                %v493 = vld [vmem:[%s433 + $0x1c8] sm:%s426]
                %494 = vst [vmem:[%s434 + $0xe8] sm:%s426] %v493
                %v495 = vld [vmem:[%s433 + $0x1e0] sm:%s426]
                %496 = vst [vmem:[%s434 + $0xf0] sm:%s426] %v495
                %v497 = vld [vmem:[%s433 + $0x1e8] sm:%s426]
                %498 = vst [vmem:[%s434 + $0xf8] sm:%s426] %v497
                %v499 = vld [vmem:[%s433 + $0x200] sm:%s426]
                %500 = vst [vmem:[%s434 + $0x100] sm:%s426] %v499
                %v501 = vld [vmem:[%s433 + $0x208] sm:%s426]
                %502 = vst [vmem:[%s434 + $0x108] sm:%s426] %v501
                %v503 = vld [vmem:[%s433 + $0x220] sm:%s426]
                %504 = vst [vmem:[%s434 + $0x110] sm:%s426] %v503
                %v505 = vld [vmem:[%s433 + $0x228] sm:%s426]
                %506 = vst [vmem:[%s434 + $0x118] sm:%s426] %v505
                %v507 = vld [vmem:[%s433 + $0x240] sm:%s426]
                %508 = vst [vmem:[%s434 + $0x120] sm:%s426] %v507
                %v509 = vld [vmem:[%s433 + $0x248] sm:%s426]
                %510 = vst [vmem:[%s434 + $0x128] sm:%s426] %v509
                %v511 = vld [vmem:[%s433 + $0x260] sm:%s426]
                %512 = vst [vmem:[%s434 + $0x130] sm:%s426] %v511
                %v513 = vld [vmem:[%s433 + $0x268] sm:%s426]
                %514 = vst [vmem:[%s434 + $0x138] sm:%s426] %v513
                %v515 = vld [vmem:[%s433 + $0x280] sm:%s426]
                %516 = vst [vmem:[%s434 + $0x140] sm:%s426] %v515
                %v517 = vld [vmem:[%s433 + $0x288] sm:%s426]
                %518 = vst [vmem:[%s434 + $0x148] sm:%s426] %v517
                %v519 = vld [vmem:[%s433 + $0x2a0] sm:%s426]
                %520 = vst [vmem:[%s434 + $0x150] sm:%s426] %v519
                %v521 = vld [vmem:[%s433 + $0x2a8] sm:%s426]
                %522 = vst [vmem:[%s434 + $0x158] sm:%s426] %v521
                %v523 = vld [vmem:[%s433 + $0x2c0] sm:%s426]
                %524 = vst [vmem:[%s434 + $0x160] sm:%s426] %v523
                %v525 = vld [vmem:[%s433 + $0x2c8] sm:%s426]
                %526 = vst [vmem:[%s434 + $0x168] sm:%s426] %v525
                %v527 = vld [vmem:[%s433 + $0x2e0] sm:%s426]
                %528 = vst [vmem:[%s434 + $0x170] sm:%s426] %v527
                %v529 = vld [vmem:[%s433 + $0x2e8] sm:%s426]
                %530 = vst [vmem:[%s434 + $0x178] sm:%s426] %v529
                %v531 = vld [vmem:[%s433 + $0x300] sm:%s426]
                %532 = vst [vmem:[%s434 + $0x180] sm:%s426] %v531
                %v533 = vld [vmem:[%s433 + $0x308] sm:%s426]
                %534 = vst [vmem:[%s434 + $0x188] sm:%s426] %v533
                %v535 = vld [vmem:[%s433 + $0x320] sm:%s426]
                %536 = vst [vmem:[%s434 + $0x190] sm:%s426] %v535
                %v537 = vld [vmem:[%s433 + $0x328] sm:%s426]
                %538 = vst [vmem:[%s434 + $0x198] sm:%s426] %v537
                %v539 = vld [vmem:[%s433 + $0x340] sm:%s426]
                %540 = vst [vmem:[%s434 + $0x1a0] sm:%s426] %v539
                %v541 = vld [vmem:[%s433 + $0x348] sm:%s426]
                %542 = vst [vmem:[%s434 + $0x1a8] sm:%s426] %v541
                %v543 = vld [vmem:[%s433 + $0x360] sm:%s426]
                %544 = vst [vmem:[%s434 + $0x1b0] sm:%s426] %v543
                %v545 = vld [vmem:[%s433 + $0x368] sm:%s426]
                %546 = vst [vmem:[%s434 + $0x1b8] sm:%s426] %v545
                %v547 = vld [vmem:[%s433 + $0x380] sm:%s426]
                %548 = vst [vmem:[%s434 + $0x1c0] sm:%s426] %v547
                %v549 = vld [vmem:[%s433 + $0x388] sm:%s426]
                %550 = vst [vmem:[%s434 + $0x1c8] sm:%s426] %v549
                %v551 = vld [vmem:[%s433 + $0x3a0] sm:%s426]
                %552 = vst [vmem:[%s434 + $0x1d0] sm:%s426] %v551
                %v553 = vld [vmem:[%s433 + $0x3a8] sm:%s426]
                %554 = vst [vmem:[%s434 + $0x1d8] sm:%s426] %v553
              $region79: #{yolo_loss.1} parent=73 // loop_footer
                %s432 = sadd.s32 1, %s428
              $region80: #{yolo_loss.1} parent=73 // loop_footer_branch
                %427 = sbr.rel target = $region76
              $region81: #{yolo_loss.1} parent=73 // loop_exit
                _
            $region74: #{yolo_loss.1} parent=65 // pred_fallthru
              _
          $region66: #{yolo_loss.1} parent=61 // pred_fallthru
            _
          %687 = vnop
        $region62: #{yolo_loss.1} parent=19 // pred_fallthru
          _
      $region20: #{yolo_loss.1} parent=5 // pred_fallthru
        _
      %p688 = scmp.le.s32.totalorder 1, %s9
      %p689 = scmp.lt.s32.totalorder %s9, 3
      %p690 = pnand %p688, %p689
      %p691 = pneg %p690
      // Predicated region
      $region97: #{yolo_loss.1} parent=5 // pred_check
        _
      $region98: #{yolo_loss.1} parent=5 // pred_check_branch
        %693 = sbr.rel (%p690) target = $region100
      $region99: #{yolo_loss.1} parent=5 // pred_region
        %s694 = ssub.s32 %s9, 1
        %s695 = sand.u32 %s43, 1
        %s696 = sand.u32 %s43, 1
        %s697 = smul.addr %s696, 480
        %s698 = scalar_lea.vmem [#allocation2], %s697
        // Predicated region
        $region101: #{yolo_loss.1} parent=99 // pred_check
          %p699 = pneg %p56
        $region102: #{yolo_loss.1} parent=99 // pred_check_branch
          %701 = sbr.rel (%p699) target = $region104
        $region103: #{yolo_loss.1} parent=99 // pred_region
          _
        $region104: #{yolo_loss.1} parent=99 // pred_fallthru
          _
        %s702 = sand.u32 %s69, 1
        %s703 = sand.u32 %s69, 1
        %s704 = smul.addr %s703, 480
        %s705 = scalar_lea.vmem [#allocation3], %s704
        // Predicated region
        $region105: #{yolo_loss.1} parent=99 // pred_check
          %p706 = pneg %p82
        $region106: #{yolo_loss.1} parent=99 // pred_check_branch
          %708 = sbr.rel (%p706) target = $region108
        $region107: #{yolo_loss.1} parent=99 // pred_region
          _
        $region108: #{yolo_loss.1} parent=99 // pred_fallthru
          _
        %p709 = pneg %p30
        %p710 = pneg %p27
        %s711 = sand.u32 %s43, 1
        %s712 = sand.u32 %s43, 1
        %s713 = smul.addr %s712, 480
        %s714 = scalar_lea.vmem [#allocation2], %s713
        %p715 = pneg %p56
        %p716 = pneg %p53
        %s717 = sand.u32 %s69, 1
        %s718 = sand.u32 %s69, 1
        %s719 = smul.addr %s718, 480
        %s720 = scalar_lea.vmem [#allocation3], %s719
        %p721 = pneg %p82
        %p722 = pneg %p79
        %p723 = pneg %p108
        %p724 = pneg %p105
        %p725 = scmp.lt.s32.totalorder %s14, 1
        %s726 = scalar_select %p725, %s14, 1
        %s727 = scalar_lea.vmem %s3, %s726
        %s728 = smul.u32 2, %s14
        %s729 = smul.u32 2, %s14
        %p730 = scmp.lt.s32.totalorder %s14, 1
        %s731 = scalar_select %p730, %s14, 1
        %s732 = scalar_lea.vmem %s3, %s731
        %v733 = vld [vmem:[%s698] sm:$0xff]
        %v734 = vld [vmem:[%s698 + $0x8] sm:$0xff]
        %s735 = scalar_lea.vmem %s698, 16 [#allocation2]
        %v736 = vld [vmem:[%s735] sm:$0xff]
        %v737 = vld [vmem:[%s735 + $0x8] sm:$0xff]
        %s738 = scalar_lea.vmem %s698, 32 [#allocation2]
        %v739 = vld [vmem:[%s738] sm:$0xff]
        %v740 = vld [vmem:[%s738 + $0x8] sm:$0xff]
        %s741 = scalar_lea.vmem %s698, 48 [#allocation2]
        %v742 = vld [vmem:[%s741] sm:$0xff]
        %v743 = vld [vmem:[%s741 + $0x8] sm:$0xff]
        %s744 = scalar_lea.vmem %s698, 64 [#allocation2]
        %v745 = vld [vmem:[%s744] sm:$0xff]
        %v746 = vld [vmem:[%s744 + $0x8] sm:$0xff]
        %s747 = scalar_lea.vmem %s698, 80 [#allocation2]
        %v748 = vld [vmem:[%s747] sm:$0xff]
        %v749 = vld [vmem:[%s747 + $0x8] sm:$0xff]
        %s750 = scalar_lea.vmem %s698, 96 [#allocation2]
        %v751 = vld [vmem:[%s750] sm:$0xff]
        %v752 = vld [vmem:[%s750 + $0x8] sm:$0xff]
        %s753 = scalar_lea.vmem %s698, 112 [#allocation2]
        %v754 = vld [vmem:[%s753] sm:$0xff]
        %v755 = vld [vmem:[%s753 + $0x8] sm:$0xff]
        %s756 = scalar_lea.vmem %s698, 128 [#allocation2]
        %v757 = vld [vmem:[%s756] sm:$0xff]
        %v758 = vld [vmem:[%s756 + $0x8] sm:$0xff]
        %s759 = scalar_lea.vmem %s698, 144 [#allocation2]
        %v760 = vld [vmem:[%s759] sm:$0xff]
        %v761 = vld [vmem:[%s759 + $0x8] sm:$0xff]
        %v762 = vld [vmem:[%s705] sm:$0xff]
        %v763 = vld [vmem:[%s705 + $0x8] sm:$0xff]
        %s764 = scalar_lea.vmem %s705, 16 [#allocation3]
        %v765 = vld [vmem:[%s764] sm:$0xff]
        %v766 = vld [vmem:[%s764 + $0x8] sm:$0xff]
        %s767 = scalar_lea.vmem %s705, 32 [#allocation3]
        %v768 = vld [vmem:[%s767] sm:$0xff]
        %v769 = vld [vmem:[%s767 + $0x8] sm:$0xff]
        %s770 = scalar_lea.vmem %s705, 48 [#allocation3]
        %v771 = vld [vmem:[%s770] sm:$0xff]
        %v772 = vld [vmem:[%s770 + $0x8] sm:$0xff]
        %s773 = scalar_lea.vmem %s705, 64 [#allocation3]
        %v774 = vld [vmem:[%s773] sm:$0xff]
        %v775 = vld [vmem:[%s773 + $0x8] sm:$0xff]
        %s776 = scalar_lea.vmem %s705, 320 [#allocation3]
        %v777 = vld [vmem:[%s776] sm:$0xff]
        %v778 = vld [vmem:[%s776 + $0x8] sm:$0xff]
        %v779 = vmul.f32 %v739, 0.5
        %v780 = vmul.f32 %v740, 0.5
        %v781 = vsub.f32 %v733, %v779
        %v782 = vsub.f32 %v734, %v780
        %v783 = vmul.f32 %v768, 0.5
        %v784 = vmul.f32 %v769, 0.5
        %v785 = vsub.f32 %v762, %v783
        %v786 = vsub.f32 %v763, %v784
        %v787 = vmax.f32 %v781, %v785
        %v788 = vmax.f32 %v782, %v786
        %v789 = vmul.f32 %v742, 0.5
        %v790 = vmul.f32 %v743, 0.5
        %v791 = vsub.f32 %v736, %v789
        %v792 = vsub.f32 %v737, %v790
        %v793 = vmul.f32 %v771, 0.5
        %v794 = vmul.f32 %v772, 0.5
        %v795 = vsub.f32 %v765, %v793
        %v796 = vsub.f32 %v766, %v794
        %v797 = vmax.f32 %v791, %v795
        %v798 = vmax.f32 %v792, %v796
        %v799 = vadd.f32 %v733, %v779
        %v800 = vadd.f32 %v734, %v780
        %v801 = vadd.f32 %v762, %v783
        %v802 = vadd.f32 %v763, %v784
        %v803 = vmin.f32 %v799, %v801
        %v804 = vmin.f32 %v800, %v802
        %v805 = vadd.f32 %v736, %v789
        %v806 = vadd.f32 %v737, %v790
        %v807 = vadd.f32 %v765, %v793
        %v808 = vadd.f32 %v766, %v794
        %v809 = vmin.f32 %v805, %v807
        %v810 = vmin.f32 %v806, %v808
        %v811 = vsub.f32 %v803, %v787
        %v812 = vsub.f32 %v804, %v788
        %v813 = vmax.f32 %v811, 0.0
        %v814 = vmax.f32 %v812, 0.0
        %v815 = vsub.f32 %v809, %v797
        %v816 = vsub.f32 %v810, %v798
        %v817 = vmax.f32 %v815, 0.0
        %v818 = vmax.f32 %v816, 0.0
        %v819 = vmul.f32 %v813, %v817
        %v820 = vmul.f32 %v814, %v818
        %v821 = vmul.f32 %v739, %v742
        %v822 = vmul.f32 %v740, %v743
        %v823 = vand.u32 2147483647, %v821
        %v824 = vand.u32 2147483647, %v822
        %v825 = vmul.f32 %v768, %v771
        %v826 = vmul.f32 %v769, %v772
        %v827 = vand.u32 2147483647, %v825
        %v828 = vand.u32 2147483647, %v826
        %v829 = vadd.f32 %v823, %v827
        %v830 = vadd.f32 %v824, %v828
        %v831 = vsub.f32 %v829, %v819
        %v832 = vsub.f32 %v830, %v820
        %v833 = vadd.f32 %v831, 1e-06
        %v834 = vadd.f32 %v832, 1e-06
        %v835 = vmul.f32 %v754, 0.5
        %v836 = vmul.f32 %v755, 0.5
        %v837 = vsub.f32 %v748, %v835
        %v838 = vsub.f32 %v749, %v836
        %v839 = vmax.f32 %v837, %v785
        %v840 = vmax.f32 %v838, %v786
        %v841 = vmul.f32 %v757, 0.5
        %v842 = vmul.f32 %v758, 0.5
        %v843 = vsub.f32 %v751, %v841
        %v844 = vsub.f32 %v752, %v842
        %v845 = vmax.f32 %v843, %v795
        %v846 = vmax.f32 %v844, %v796
        %v847 = vadd.f32 %v748, %v835
        %v848 = vadd.f32 %v749, %v836
        %v849 = vmin.f32 %v847, %v801
        %v850 = vmin.f32 %v848, %v802
        %v851 = vadd.f32 %v751, %v841
        %v852 = vadd.f32 %v752, %v842
        %v853 = vmin.f32 %v851, %v807
        %v854 = vmin.f32 %v852, %v808
        %v855 = vsub.f32 %v849, %v839
        %v856 = vsub.f32 %v850, %v840
        %v857 = vmax.f32 %v855, 0.0
        %v858 = vmax.f32 %v856, 0.0
        %v859 = vsub.f32 %v853, %v845
        %v860 = vsub.f32 %v854, %v846
        %v861 = vmax.f32 %v859, 0.0
        %v862 = vmax.f32 %v860, 0.0
        %v863 = vmul.f32 %v857, %v861
        %v864 = vmul.f32 %v858, %v862
        %v865 = vmul.f32 %v754, %v757
        %v866 = vmul.f32 %v755, %v758
        %v867 = vand.u32 2147483647, %v865
        %v868 = vand.u32 2147483647, %v866
        %v869 = vadd.f32 %v867, %v827
        %v870 = vadd.f32 %v868, %v828
        %v871 = vsub.f32 %v869, %v863
        %v872 = vsub.f32 %v870, %v864
        %v873 = vadd.f32 %v871, 1e-06
        %v874 = vadd.f32 %v872, 1e-06
        %v875 = vmul.f32 %v863, %v833
        %v876 = vmul.f32 %v864, %v834
        %v877 = vmul.f32 %v819, %v873
        %v878 = vmul.f32 %v820, %v874
        %vm879 = vcmp.gt.f32.partialorder %v875, %v877
        %vm880 = vcmp.gt.f32.partialorder %v876, %v878
        %v881 = vsel %vm879, %v748, %v733
        %v882 = vsel %vm880, %v749, %v734
        %v883 = vsel %vm879, %v751, %v736
        %v884 = vsel %vm880, %v752, %v737
        %v885 = vsel %vm879, %v754, %v739
        %v886 = vsel %vm880, %v755, %v740
        %v887 = vmax.f32 %v885, 1e-06
        %v888 = vmax.f32 %v886, 1e-06
        %v889 = vrsqrt.pop %v887
        %v890 = vmul.f32 %v887, %v889
        %vm891 = vcmp.eq.f32.partialorder %v887, inf
        %v892 = vsel %vm891, %v887, %v890
        %vm893 = vcmp.eq.f32.partialorder %v887, 0.0
        %v894 = vand.u32 %v887, 2147483648
        %v895 = vsel %vm893, %v894, %v892
        %v896 = vrsqrt.pop %v888
        %v897 = vmul.f32 %v888, %v896
        %vm898 = vcmp.eq.f32.partialorder %v888, inf
        %v899 = vsel %vm898, %v888, %v897
        %vm900 = vcmp.eq.f32.partialorder %v888, 0.0
        %v901 = vand.u32 %v888, 2147483648
        %v902 = vsel %vm900, %v901, %v899
        %v903 = vsel %vm879, %v757, %v742
        %v904 = vsel %vm880, %v758, %v743
        %v905 = vmax.f32 %v903, 1e-06
        %v906 = vmax.f32 %v904, 1e-06
        %v907 = vrsqrt.pop %v905
        %v908 = vmul.f32 %v905, %v907
        %vm909 = vcmp.eq.f32.partialorder %v905, inf
        %v910 = vsel %vm909, %v905, %v908
        %vm911 = vcmp.eq.f32.partialorder %v905, 0.0
        %v912 = vand.u32 %v905, 2147483648
        %v913 = vsel %vm911, %v912, %v910
        %v914 = vrsqrt.pop %v906
        %v915 = vmul.f32 %v906, %v914
        %vm916 = vcmp.eq.f32.partialorder %v906, inf
        %v917 = vsel %vm916, %v906, %v915
        %vm918 = vcmp.eq.f32.partialorder %v906, 0.0
        %v919 = vand.u32 %v906, 2147483648
        %v920 = vsel %vm918, %v919, %v917
        %v921 = vmul.f32 %v777, %v768
        %v922 = vmul.f32 %v778, %v769
        %v923 = vmax.f32 %v921, 1e-06
        %v924 = vmax.f32 %v922, 1e-06
        %v925 = vrsqrt.pop %v923
        %v926 = vmul.f32 %v923, %v925
        %vm927 = vcmp.eq.f32.partialorder %v923, inf
        %v928 = vsel %vm927, %v923, %v926
        %vm929 = vcmp.eq.f32.partialorder %v923, 0.0
        %v930 = vand.u32 %v923, 2147483648
        %v931 = vsel %vm929, %v930, %v928
        %v932 = vrsqrt.pop %v924
        %v933 = vmul.f32 %v924, %v932
        %vm934 = vcmp.eq.f32.partialorder %v924, inf
        %v935 = vsel %vm934, %v924, %v933
        %vm936 = vcmp.eq.f32.partialorder %v924, 0.0
        %v937 = vand.u32 %v924, 2147483648
        %v938 = vsel %vm936, %v937, %v935
        %v939 = vmul.f32 %v777, %v771
        %v940 = vmul.f32 %v778, %v772
        %v941 = vmax.f32 %v939, 1e-06
        %v942 = vmax.f32 %v940, 1e-06
        %v943 = vrsqrt.pop %v941
        %v944 = vmul.f32 %v941, %v943
        %vm945 = vcmp.eq.f32.partialorder %v941, inf
        %v946 = vsel %vm945, %v941, %v944
        %vm947 = vcmp.eq.f32.partialorder %v941, 0.0
        %v948 = vand.u32 %v941, 2147483648
        %v949 = vsel %vm947, %v948, %v946
        %v950 = vrsqrt.pop %v942
        %v951 = vmul.f32 %v942, %v950
        %vm952 = vcmp.eq.f32.partialorder %v942, inf
        %v953 = vsel %vm952, %v942, %v951
        %vm954 = vcmp.eq.f32.partialorder %v942, 0.0
        %v955 = vand.u32 %v942, 2147483648
        %v956 = vsel %vm954, %v955, %v953
        %v957 = vmul.f32 %v777, %v762
        %v958 = vmul.f32 %v778, %v763
        %v959 = vsub.f32 %v881, %v957
        %v960 = vsub.f32 %v882, %v958
        %v961 = vmul.f32 %v959, %v959
        %v962 = vmul.f32 %v960, %v960
        %v963 = vmul.f32 %v777, %v765
        %v964 = vmul.f32 %v778, %v766
        %v965 = vsub.f32 %v883, %v963
        %v966 = vsub.f32 %v884, %v964
        %v967 = vmul.f32 %v965, %v965
        %v968 = vmul.f32 %v966, %v966
        %v969 = vadd.f32 %v961, %v967
        %v970 = vadd.f32 %v962, %v968
        %v971 = vsub.f32 %v895, %v931
        %v972 = vsub.f32 %v902, %v938
        %v973 = vmul.f32 %v971, %v971
        %v974 = vmul.f32 %v972, %v972
        %v975 = vadd.f32 %v969, %v973
        %v976 = vadd.f32 %v970, %v974
        %v977 = vsub.f32 %v913, %v949
        %v978 = vsub.f32 %v920, %v956
        %v979 = vmul.f32 %v977, %v977
        %v980 = vmul.f32 %v978, %v978
        %v981 = vadd.f32 %v975, %v979
        %v982 = vadd.f32 %v976, %v980
        %v983 = vsel %vm879, %v760, %v745
        %v984 = vsel %vm880, %v761, %v746
        %v985 = vmul.f32 %v777, %v983
        %v986 = vmul.f32 %v778, %v984
        %v987 = vmul.f32 %v777, %v774
        %v988 = vmul.f32 %v778, %v775
        %v989 = vsub.f32 %v985, %v987
        %v990 = vsub.f32 %v986, %v988
        %v991 = vmul.f32 %v989, %v989
        %v992 = vmul.f32 %v990, %v990
        %v993 = vsub.f32 1.0, %v777
        %v994 = vsub.f32 1.0, %v778
        %v995 = vmul.f32 %v745, %v745
        %v996 = vmul.f32 %v746, %v746
        %v997 = vmul.f32 %v760, %v760
        %v998 = vmul.f32 %v761, %v761
        %v999 = vadd.f32 %v995, %v997
        %v1000 = vadd.f32 %v996, %v998
        %v1001 = vadd.f32 %v745, %v760
        %v1002 = vadd.f32 %v746, %v761
        %v1003 = vmul.f32 %v993, %v1001
        %v1004 = vmul.f32 %v994, %v1002
        %v1005 = vmul.f32 %v774, %v774
        %v1006 = vmul.f32 %v775, %v775
        %v1007 = vld [vmem:[%s0] sm:$0xff]
        %v1008 = vld [vmem:[%s0 + $0x8] sm:$0xff]
        %v1009 = vld [vmem:[%s0 + $0x10] sm:$0xff]
        %v1010 = vld [vmem:[%s0 + $0x18] sm:$0xff]
        %v1011 = vld [vmem:[%s0 + $0x20] sm:$0xff]
        %v1012 = vld [vmem:[%s0 + $0x28] sm:$0xff]
        %v1013 = vld [vmem:[%s0 + $0x30] sm:$0x1]
        %s1014 = scalar_lea.vmem %s0, 56
        %v1015 = vld [vmem:[%s1014] sm:$0xff]
        %v1016 = vld [vmem:[%s1014 + $0x8] sm:$0xff]
        %v1017 = vld [vmem:[%s1014 + $0x10] sm:$0xff]
        %v1018 = vld [vmem:[%s1014 + $0x18] sm:$0xff]
        %v1019 = vld [vmem:[%s1014 + $0x20] sm:$0xff]
        %v1020 = vld [vmem:[%s1014 + $0x28] sm:$0xff]
        %v1021 = vld [vmem:[%s1014 + $0x30] sm:$0x1]
        %vm1022 = vcmask 400384
        %v1024 = vsel %vm1022, %v1003, 0
        %v1027 = vsel %vm1022, %v1004, 0
        %vm1029 = vcmask 1040384
        %v1031 = vsel %vm1029, %v1013, 0
        %1033 = vmatprep.subr.mxu0 0.0
        %1034 = vmatpush1.msra.mxu0 0.0
        %1035 = vmatprep.subr.mxu0 0.0
        %1036 = vmatpush1.msra.mxu0 0.0
        %1037 = vmatprep.subr.mxu0 0.0
        %1038 = vmatpush1.msra.mxu0 0.0
        %1039 = vmatprep.subr.mxu0 0.0
        %1040 = vmatpush1.msra.mxu0 0.0
        %1041 = vmatprep.subr.mxu0 0.0
        %1042 = vmatpush1.msra.mxu0 0.0
        %1043 = vmatprep.subr.mxu0 0.0
        %1044 = vmatpush1.msra.mxu0 0.0
        %1045 = vmatprep.subr.mxu0 0.0
        %1046 = vmatpush1.msra.mxu0 0.0
        %1047 = vmatprep.subr.mxu0 0.0
        %1048 = vmatpush1.msra.mxu0 0.0
        %1049 = vmatprep.subr.mxu0 0.0
        %1050 = vmatpush1.msra.mxu0 0.0
        %1051 = vmatprep.subr.mxu0 0.0
        %1052 = vmatpush1.msra.mxu0 %v1031
        %1053 = vmatprep.subr.mxu0 0.0
        %1054 = vmatpush1.msra.mxu0 %v1012
        %1055 = vmatprep.subr.mxu0 0.0
        %1056 = vmatpush1.msra.mxu0 %v1011
        %1057 = vmatprep.subr.mxu0 0.0
        %1058 = vmatpush1.msra.mxu0 %v1010
        %1059 = vmatprep.subr.mxu0 0.0
        %1060 = vmatpush1.msra.mxu0 %v1009
        %1061 = vmatprep.subr.mxu0 0.0
        %1062 = vmatpush1.msra.mxu0 %v1008
        %1063 = vmatprep.subr.mxu0 0.0
        %1064 = vmatpush1.msra.mxu0 %v1007
        %1065 = vmatprep.subr.mxu0 0.0
        %1066 = vmatpush2.msra.mxu0 0.0
        %1067 = vmatprep.subr.mxu0 0.0
        %1068 = vmatpush2.msra.mxu0 0.0
        %1069 = vmatprep.subr.mxu0 0.0
        %1070 = vmatpush2.msra.mxu0 0.0
        %1071 = vmatprep.subr.mxu0 0.0
        %1072 = vmatpush2.msra.mxu0 0.0
        %1073 = vmatprep.subr.mxu0 0.0
        %1074 = vmatpush2.msra.mxu0 0.0
        %1075 = vmatprep.subr.mxu0 0.0
        %1076 = vmatpush2.msra.mxu0 0.0
        %1077 = vmatprep.subr.mxu0 0.0
        %1078 = vmatpush2.msra.mxu0 0.0
        %1079 = vmatprep.subr.mxu0 0.0
        %1080 = vmatpush2.msra.mxu0 0.0
        %1081 = vmatprep.subr.mxu0 0.0
        %1082 = vmatpush2.msra.mxu0 0.0
        %1083 = vmatprep.subr.mxu0 0.0
        %1084 = vmatpush2.msra.mxu0 0.0
        %1085 = vmatprep.subr.mxu0 0.0
        %1086 = vmatpush2.msra.mxu0 0.0
        %1087 = vmatprep.subr.mxu0 0.0
        %1088 = vmatpush2.msra.mxu0 0.0
        %1089 = vmatprep.subr.mxu0 0.0
        %1090 = vmatpush2.msra.mxu0 0.0
        %1091 = vmatprep.subr.mxu0 0.0
        %1092 = vmatpush2.msra.mxu0 0.0
        %1093 = vmatprep.subr.mxu0 0.0
        %1094 = vmatpush2.msra.mxu0 0.0
        %1095 = vmatprep.subr.mxu0 0.0
        %1096 = vmatpush2.msra.mxu0 0.0
        %1097 = vmatprep.mubr.f32.mxu0 0.0
        %1098 = vmatmul.mubr.f32.gmra.mxu0 %v1024
        %v1099 = vpop.f32.mrf.mxu0
        %v1100 = vadd.f32 0.0, %v1099
        %v1101 = vpop.f32.mrf.mxu0
        %1102 = vmatprep.mubr.f32.mxu0 0.0
        %1103 = vmatmul.mubr.f32.gmra.mxu0 %v1027
        %v1104 = vpop.f32.mrf.mxu0
        %v1105 = vadd.f32 0.0, %v1104
        %v1106 = vpop.f32.mrf.mxu0
        %1107 = vdwg.mxu0
        %v1109 = vsel %vm1022, %v993, 0
        %v1112 = vsel %vm1022, %v994, 0
        %1114 = vmatprep.subr.mxu0 0.0
        %1115 = vmatpush1.msra.mxu0 0.0
        %1116 = vmatprep.subr.mxu0 0.0
        %1117 = vmatpush1.msra.mxu0 0.0
        %1118 = vmatprep.subr.mxu0 0.0
        %1119 = vmatpush1.msra.mxu0 0.0
        %1120 = vmatprep.subr.mxu0 0.0
        %1121 = vmatpush1.msra.mxu0 0.0
        %1122 = vmatprep.subr.mxu0 0.0
        %1123 = vmatpush1.msra.mxu0 0.0
        %1124 = vmatprep.subr.mxu0 0.0
        %1125 = vmatpush1.msra.mxu0 0.0
        %1126 = vmatprep.subr.mxu0 0.0
        %1127 = vmatpush1.msra.mxu0 0.0
        %1128 = vmatprep.subr.mxu0 0.0
        %1129 = vmatpush1.msra.mxu0 0.0
        %1130 = vmatprep.subr.mxu0 0.0
        %1131 = vmatpush1.msra.mxu0 0.0
        %1132 = vmatprep.subr.mxu0 0.0
        %1133 = vmatpush1.msra.mxu0 %v1031
        %1134 = vmatprep.subr.mxu0 0.0
        %1135 = vmatpush1.msra.mxu0 %v1012
        %1136 = vmatprep.subr.mxu0 0.0
        %1137 = vmatpush1.msra.mxu0 %v1011
        %1138 = vmatprep.subr.mxu0 0.0
        %1139 = vmatpush1.msra.mxu0 %v1010
        %1140 = vmatprep.subr.mxu0 0.0
        %1141 = vmatpush1.msra.mxu0 %v1009
        %1142 = vmatprep.subr.mxu0 0.0
        %1143 = vmatpush1.msra.mxu0 %v1008
        %1144 = vmatprep.subr.mxu0 0.0
        %1145 = vmatpush1.msra.mxu0 %v1007
        %1146 = vmatprep.subr.mxu0 0.0
        %1147 = vmatpush2.msra.mxu0 0.0
        %1148 = vmatprep.subr.mxu0 0.0
        %1149 = vmatpush2.msra.mxu0 0.0
        %1150 = vmatprep.subr.mxu0 0.0
        %1151 = vmatpush2.msra.mxu0 0.0
        %1152 = vmatprep.subr.mxu0 0.0
        %1153 = vmatpush2.msra.mxu0 0.0
        %1154 = vmatprep.subr.mxu0 0.0
        %1155 = vmatpush2.msra.mxu0 0.0
        %1156 = vmatprep.subr.mxu0 0.0
        %1157 = vmatpush2.msra.mxu0 0.0
        %1158 = vmatprep.subr.mxu0 0.0
        %1159 = vmatpush2.msra.mxu0 0.0
        %1160 = vmatprep.subr.mxu0 0.0
        %1161 = vmatpush2.msra.mxu0 0.0
        %1162 = vmatprep.subr.mxu0 0.0
        %1163 = vmatpush2.msra.mxu0 0.0
        %1164 = vmatprep.subr.mxu0 0.0
        %1165 = vmatpush2.msra.mxu0 0.0
        %1166 = vmatprep.subr.mxu0 0.0
        %1167 = vmatpush2.msra.mxu0 0.0
        %1168 = vmatprep.subr.mxu0 0.0
        %1169 = vmatpush2.msra.mxu0 0.0
        %1170 = vmatprep.subr.mxu0 0.0
        %1171 = vmatpush2.msra.mxu0 0.0
        %1172 = vmatprep.subr.mxu0 0.0
        %1173 = vmatpush2.msra.mxu0 0.0
        %1174 = vmatprep.subr.mxu0 0.0
        %1175 = vmatpush2.msra.mxu0 0.0
        %1176 = vmatprep.subr.mxu0 0.0
        %1177 = vmatpush2.msra.mxu0 0.0
        %1178 = vmatprep.mubr.f32.mxu0 0.0
        %1179 = vmatmul.mubr.f32.gmra.mxu0 %v1109
        %v1180 = vpop.f32.mrf.mxu0
        %v1181 = vadd.f32 0.0, %v1180
        %v1182 = vpop.f32.mrf.mxu0
        %1183 = vmatprep.mubr.f32.mxu0 0.0
        %1184 = vmatmul.mubr.f32.gmra.mxu0 %v1112
        %v1185 = vpop.f32.mrf.mxu0
        %v1186 = vadd.f32 0.0, %v1185
        %v1187 = vpop.f32.mrf.mxu0
        %1188 = vdwg.mxu0
        %v1190 = vsel %vm1022, %v774, 0
        %v1193 = vsel %vm1022, %v775, 0
        %v1196 = vsel %vm1029, %v1021, 0
        %1198 = vmatprep.subr.mxu0 0.0
        %1199 = vmatpush1.msra.mxu0 0.0
        %1200 = vmatprep.subr.mxu0 0.0
        %1201 = vmatpush1.msra.mxu0 0.0
        %1202 = vmatprep.subr.mxu0 0.0
        %1203 = vmatpush1.msra.mxu0 0.0
        %1204 = vmatprep.subr.mxu0 0.0
        %1205 = vmatpush1.msra.mxu0 0.0
        %1206 = vmatprep.subr.mxu0 0.0
        %1207 = vmatpush1.msra.mxu0 0.0
        %1208 = vmatprep.subr.mxu0 0.0
        %1209 = vmatpush1.msra.mxu0 0.0
        %1210 = vmatprep.subr.mxu0 0.0
        %1211 = vmatpush1.msra.mxu0 0.0
        %1212 = vmatprep.subr.mxu0 0.0
        %1213 = vmatpush1.msra.mxu0 0.0
        %1214 = vmatprep.subr.mxu0 0.0
        %1215 = vmatpush1.msra.mxu0 0.0
        %1216 = vmatprep.subr.mxu0 0.0
        %1217 = vmatpush1.msra.mxu0 %v1196
        %1218 = vmatprep.subr.mxu0 0.0
        %1219 = vmatpush1.msra.mxu0 %v1020
        %1220 = vmatprep.subr.mxu0 0.0
        %1221 = vmatpush1.msra.mxu0 %v1019
        %1222 = vmatprep.subr.mxu0 0.0
        %1223 = vmatpush1.msra.mxu0 %v1018
        %1224 = vmatprep.subr.mxu0 0.0
        %1225 = vmatpush1.msra.mxu0 %v1017
        %1226 = vmatprep.subr.mxu0 0.0
        %1227 = vmatpush1.msra.mxu0 %v1016
        %1228 = vmatprep.subr.mxu0 0.0
        %1229 = vmatpush1.msra.mxu0 %v1015
        %1230 = vmatprep.subr.mxu0 0.0
        %1231 = vmatpush2.msra.mxu0 0.0
        %1232 = vmatprep.subr.mxu0 0.0
        %1233 = vmatpush2.msra.mxu0 0.0
        %1234 = vmatprep.subr.mxu0 0.0
        %1235 = vmatpush2.msra.mxu0 0.0
        %1236 = vmatprep.subr.mxu0 0.0
        %1237 = vmatpush2.msra.mxu0 0.0
        %1238 = vmatprep.subr.mxu0 0.0
        %1239 = vmatpush2.msra.mxu0 0.0
        %1240 = vmatprep.subr.mxu0 0.0
        %1241 = vmatpush2.msra.mxu0 0.0
        %1242 = vmatprep.subr.mxu0 0.0
        %1243 = vmatpush2.msra.mxu0 0.0
        %1244 = vmatprep.subr.mxu0 0.0
        %1245 = vmatpush2.msra.mxu0 0.0
        %1246 = vmatprep.subr.mxu0 0.0
        %1247 = vmatpush2.msra.mxu0 0.0
        %1248 = vmatprep.subr.mxu0 0.0
        %1249 = vmatpush2.msra.mxu0 0.0
        %1250 = vmatprep.subr.mxu0 0.0
        %1251 = vmatpush2.msra.mxu0 0.0
        %1252 = vmatprep.subr.mxu0 0.0
        %1253 = vmatpush2.msra.mxu0 0.0
        %1254 = vmatprep.subr.mxu0 0.0
        %1255 = vmatpush2.msra.mxu0 0.0
        %1256 = vmatprep.subr.mxu0 0.0
        %1257 = vmatpush2.msra.mxu0 0.0
        %1258 = vmatprep.subr.mxu0 0.0
        %1259 = vmatpush2.msra.mxu0 0.0
        %1260 = vmatprep.subr.mxu0 0.0
        %1261 = vmatpush2.msra.mxu0 0.0
        %1262 = vmatprep.mubr.f32.mxu0 0.0
        %1263 = vmatmul.mubr.f32.gmra.mxu0 %v1190
        %v1264 = vpop.f32.mrf.mxu0
        %v1265 = vadd.f32 0.0, %v1264
        %v1266 = vpop.f32.mrf.mxu0
        %1267 = vmatprep.mubr.f32.mxu0 0.0
        %1268 = vmatmul.mubr.f32.gmra.mxu0 %v1193
        %v1269 = vpop.f32.mrf.mxu0
        %v1270 = vadd.f32 0.0, %v1269
        %v1271 = vpop.f32.mrf.mxu0
        %1272 = vdwg.mxu0
        %v1274 = vsel %vm1022, %v1005, 0
        %v1277 = vsel %vm1022, %v1006, 0
        %1279 = vmatprep.subr.mxu0 0.0
        %1280 = vmatpush1.msra.mxu0 0.0
        %1281 = vmatprep.subr.mxu0 0.0
        %1282 = vmatpush1.msra.mxu0 0.0
        %1283 = vmatprep.subr.mxu0 0.0
        %1284 = vmatpush1.msra.mxu0 0.0
        %1285 = vmatprep.subr.mxu0 0.0
        %1286 = vmatpush1.msra.mxu0 0.0
        %1287 = vmatprep.subr.mxu0 0.0
        %1288 = vmatpush1.msra.mxu0 0.0
        %1289 = vmatprep.subr.mxu0 0.0
        %1290 = vmatpush1.msra.mxu0 0.0
        %1291 = vmatprep.subr.mxu0 0.0
        %1292 = vmatpush1.msra.mxu0 0.0
        %1293 = vmatprep.subr.mxu0 0.0
        %1294 = vmatpush1.msra.mxu0 0.0
        %1295 = vmatprep.subr.mxu0 0.0
        %1296 = vmatpush1.msra.mxu0 0.0
        %1297 = vmatprep.subr.mxu0 0.0
        %1298 = vmatpush1.msra.mxu0 %v1196
        %1299 = vmatprep.subr.mxu0 0.0
        %1300 = vmatpush1.msra.mxu0 %v1020
        %1301 = vmatprep.subr.mxu0 0.0
        %1302 = vmatpush1.msra.mxu0 %v1019
        %1303 = vmatprep.subr.mxu0 0.0
        %1304 = vmatpush1.msra.mxu0 %v1018
        %1305 = vmatprep.subr.mxu0 0.0
        %1306 = vmatpush1.msra.mxu0 %v1017
        %1307 = vmatprep.subr.mxu0 0.0
        %1308 = vmatpush1.msra.mxu0 %v1016
        %1309 = vmatprep.subr.mxu0 0.0
        %1310 = vmatpush1.msra.mxu0 %v1015
        %1311 = vmatprep.subr.mxu0 0.0
        %1312 = vmatpush2.msra.mxu0 0.0
        %1313 = vmatprep.subr.mxu0 0.0
        %1314 = vmatpush2.msra.mxu0 0.0
        %1315 = vmatprep.subr.mxu0 0.0
        %1316 = vmatpush2.msra.mxu0 0.0
        %1317 = vmatprep.subr.mxu0 0.0
        %1318 = vmatpush2.msra.mxu0 0.0
        %1319 = vmatprep.subr.mxu0 0.0
        %1320 = vmatpush2.msra.mxu0 0.0
        %1321 = vmatprep.subr.mxu0 0.0
        %1322 = vmatpush2.msra.mxu0 0.0
        %1323 = vmatprep.subr.mxu0 0.0
        %1324 = vmatpush2.msra.mxu0 0.0
        %1325 = vmatprep.subr.mxu0 0.0
        %1326 = vmatpush2.msra.mxu0 0.0
        %1327 = vmatprep.subr.mxu0 0.0
        %1328 = vmatpush2.msra.mxu0 0.0
        %1329 = vmatprep.subr.mxu0 0.0
        %1330 = vmatpush2.msra.mxu0 0.0
        %1331 = vmatprep.subr.mxu0 0.0
        %1332 = vmatpush2.msra.mxu0 0.0
        %1333 = vmatprep.subr.mxu0 0.0
        %1334 = vmatpush2.msra.mxu0 0.0
        %1335 = vmatprep.subr.mxu0 0.0
        %1336 = vmatpush2.msra.mxu0 0.0
        %1337 = vmatprep.subr.mxu0 0.0
        %1338 = vmatpush2.msra.mxu0 0.0
        %1339 = vmatprep.subr.mxu0 0.0
        %1340 = vmatpush2.msra.mxu0 0.0
        %1341 = vmatprep.subr.mxu0 0.0
        %1342 = vmatpush2.msra.mxu0 0.0
        %1343 = vmatprep.mubr.f32.mxu0 0.0
        %1344 = vmatmul.mubr.f32.gmra.mxu0 %v1274
        %v1345 = vpop.f32.mrf.mxu0
        %v1346 = vadd.f32 0.0, %v1345
        %v1347 = vpop.f32.mrf.mxu0
        %1348 = vmatprep.mubr.f32.mxu0 0.0
        %1349 = vmatmul.mubr.f32.gmra.mxu0 %v1277
        %v1350 = vpop.f32.mrf.mxu0
        %v1351 = vadd.f32 0.0, %v1350
        %v1352 = vpop.f32.mrf.mxu0
        %1353 = vdwg.mxu0
        %v1354 = vmul.f32 %v993, 7.0
        %v1355 = vmul.f32 %v994, 7.0
        %v1356 = vmul.f32 %v1354, %v999
        %v1357 = vmul.f32 %v1355, %v1000
        %v1358 = vmul.f32 %v1100, -2.0
        %v1359 = vmul.f32 %v1105, -2.0
        %v1360 = vmul.f32 %v1358, %v1265
        %v1361 = vmul.f32 %v1359, %v1270
        %v1362 = vmul.f32 %v1181, 2.0
        %v1363 = vmul.f32 %v1186, 2.0
        %v1364 = vmul.f32 %v1362, %v1346
        %v1365 = vmul.f32 %v1363, %v1351
        %v1366 = vadd.f32 %v1360, %v1364
        %v1367 = vadd.f32 %v1361, %v1365
        %v1368 = vmul.f32 %v1366, 0.14285715
        %v1369 = vmul.f32 %v1367, 0.14285715
        %v1370 = vadd.f32 %v1356, %v1368
        %v1371 = vadd.f32 %v1357, %v1369
        %s1372 = scalar_lea.vmem %s698, 160 [#allocation2]
        %v1373 = vld [vmem:[%s1372] sm:$0xff]
        %v1374 = vld [vmem:[%s1372 + $0x8] sm:$0xff]
        %s1375 = scalar_lea.vmem %s705, 160 [#allocation3]
        %v1376 = vld [vmem:[%s1375] sm:$0xff]
        %v1377 = vld [vmem:[%s1375 + $0x8] sm:$0xff]
        %v1378 = vsub.f32 %v1373, %v1376
        %v1379 = vsub.f32 %v1374, %v1377
        %v1380 = vmul.f32 %v1378, %v1378
        %v1381 = vmul.f32 %v1379, %v1379
        %v1382 = vadd.f32 %v1380, 0.0
        %v1383 = vadd.f32 %v1381, 0.0
        %s1384 = scalar_lea.vmem %s698, 176 [#allocation2]
        %v1385 = vld [vmem:[%s1384] sm:$0xff]
        %v1386 = vld [vmem:[%s1384 + $0x8] sm:$0xff]
        %s1387 = scalar_lea.vmem %s705, 176 [#allocation3]
        %v1388 = vld [vmem:[%s1387] sm:$0xff]
        %v1389 = vld [vmem:[%s1387 + $0x8] sm:$0xff]
        %v1390 = vsub.f32 %v1385, %v1388
        %v1391 = vsub.f32 %v1386, %v1389
        %v1392 = vmul.f32 %v1390, %v1390
        %v1393 = vmul.f32 %v1391, %v1391
        %v1394 = vadd.f32 %v1382, %v1392
        %v1395 = vadd.f32 %v1383, %v1393
        %s1396 = scalar_lea.vmem %s698, 192 [#allocation2]
        %v1397 = vld [vmem:[%s1396] sm:$0xff]
        %v1398 = vld [vmem:[%s1396 + $0x8] sm:$0xff]
        %s1399 = scalar_lea.vmem %s705, 192 [#allocation3]
        %v1400 = vld [vmem:[%s1399] sm:$0xff]
        %v1401 = vld [vmem:[%s1399 + $0x8] sm:$0xff]
        %v1402 = vsub.f32 %v1397, %v1400
        %v1403 = vsub.f32 %v1398, %v1401
        %v1404 = vmul.f32 %v1402, %v1402
        %v1405 = vmul.f32 %v1403, %v1403
        %v1406 = vadd.f32 %v1394, %v1404
        %v1407 = vadd.f32 %v1395, %v1405
        %s1408 = scalar_lea.vmem %s698, 208 [#allocation2]
        %v1409 = vld [vmem:[%s1408] sm:$0xff]
        %v1410 = vld [vmem:[%s1408 + $0x8] sm:$0xff]
        %s1411 = scalar_lea.vmem %s705, 208 [#allocation3]
        %v1412 = vld [vmem:[%s1411] sm:$0xff]
        %v1413 = vld [vmem:[%s1411 + $0x8] sm:$0xff]
        %v1414 = vsub.f32 %v1409, %v1412
        %v1415 = vsub.f32 %v1410, %v1413
        %v1416 = vmul.f32 %v1414, %v1414
        %v1417 = vmul.f32 %v1415, %v1415
        %v1418 = vadd.f32 %v1406, %v1416
        %v1419 = vadd.f32 %v1407, %v1417
        %s1420 = scalar_lea.vmem %s698, 224 [#allocation2]
        %v1421 = vld [vmem:[%s1420] sm:$0xff]
        %v1422 = vld [vmem:[%s1420 + $0x8] sm:$0xff]
        %s1423 = scalar_lea.vmem %s705, 224 [#allocation3]
        %v1424 = vld [vmem:[%s1423] sm:$0xff]
        %v1425 = vld [vmem:[%s1423 + $0x8] sm:$0xff]
        %v1426 = vsub.f32 %v1421, %v1424
        %v1427 = vsub.f32 %v1422, %v1425
        %v1428 = vmul.f32 %v1426, %v1426
        %v1429 = vmul.f32 %v1427, %v1427
        %v1430 = vadd.f32 %v1418, %v1428
        %v1431 = vadd.f32 %v1419, %v1429
        %s1432 = scalar_lea.vmem %s698, 240 [#allocation2]
        %v1433 = vld [vmem:[%s1432] sm:$0xff]
        %v1434 = vld [vmem:[%s1432 + $0x8] sm:$0xff]
        %s1435 = scalar_lea.vmem %s705, 240 [#allocation3]
        %v1436 = vld [vmem:[%s1435] sm:$0xff]
        %v1437 = vld [vmem:[%s1435 + $0x8] sm:$0xff]
        %v1438 = vsub.f32 %v1433, %v1436
        %v1439 = vsub.f32 %v1434, %v1437
        %v1440 = vmul.f32 %v1438, %v1438
        %v1441 = vmul.f32 %v1439, %v1439
        %v1442 = vadd.f32 %v1430, %v1440
        %v1443 = vadd.f32 %v1431, %v1441
        %s1444 = scalar_lea.vmem %s698, 256 [#allocation2]
        %v1445 = vld [vmem:[%s1444] sm:$0xff]
        %v1446 = vld [vmem:[%s1444 + $0x8] sm:$0xff]
        %s1447 = scalar_lea.vmem %s705, 256 [#allocation3]
        %v1448 = vld [vmem:[%s1447] sm:$0xff]
        %v1449 = vld [vmem:[%s1447 + $0x8] sm:$0xff]
        %v1450 = vsub.f32 %v1445, %v1448
        %v1451 = vsub.f32 %v1446, %v1449
        %v1452 = vmul.f32 %v1450, %v1450
        %v1453 = vmul.f32 %v1451, %v1451
        %v1454 = vadd.f32 %v1442, %v1452
        %v1455 = vadd.f32 %v1443, %v1453
        %s1456 = scalar_lea.vmem %s698, 272 [#allocation2]
        %v1457 = vld [vmem:[%s1456] sm:$0xff]
        %v1458 = vld [vmem:[%s1456 + $0x8] sm:$0xff]
        %s1459 = scalar_lea.vmem %s705, 272 [#allocation3]
        %v1460 = vld [vmem:[%s1459] sm:$0xff]
        %v1461 = vld [vmem:[%s1459 + $0x8] sm:$0xff]
        %v1462 = vsub.f32 %v1457, %v1460
        %v1463 = vsub.f32 %v1458, %v1461
        %v1464 = vmul.f32 %v1462, %v1462
        %v1465 = vmul.f32 %v1463, %v1463
        %v1466 = vadd.f32 %v1454, %v1464
        %v1467 = vadd.f32 %v1455, %v1465
        %s1468 = scalar_lea.vmem %s698, 288 [#allocation2]
        %v1469 = vld [vmem:[%s1468] sm:$0xff]
        %v1470 = vld [vmem:[%s1468 + $0x8] sm:$0xff]
        %s1471 = scalar_lea.vmem %s705, 288 [#allocation3]
        %v1472 = vld [vmem:[%s1471] sm:$0xff]
        %v1473 = vld [vmem:[%s1471 + $0x8] sm:$0xff]
        %v1474 = vsub.f32 %v1469, %v1472
        %v1475 = vsub.f32 %v1470, %v1473
        %v1476 = vmul.f32 %v1474, %v1474
        %v1477 = vmul.f32 %v1475, %v1475
        %v1478 = vadd.f32 %v1466, %v1476
        %v1479 = vadd.f32 %v1467, %v1477
        %s1480 = scalar_lea.vmem %s698, 304 [#allocation2]
        %v1481 = vld [vmem:[%s1480] sm:$0xff]
        %v1482 = vld [vmem:[%s1480 + $0x8] sm:$0xff]
        %s1483 = scalar_lea.vmem %s705, 304 [#allocation3]
        %v1484 = vld [vmem:[%s1483] sm:$0xff]
        %v1485 = vld [vmem:[%s1483 + $0x8] sm:$0xff]
        %v1486 = vsub.f32 %v1481, %v1484
        %v1487 = vsub.f32 %v1482, %v1485
        %v1488 = vmul.f32 %v1486, %v1486
        %v1489 = vmul.f32 %v1487, %v1487
        %v1490 = vadd.f32 %v1478, %v1488
        %v1491 = vadd.f32 %v1479, %v1489
        %s1492 = scalar_lea.vmem %s698, 320 [#allocation2]
        %v1493 = vld [vmem:[%s1492] sm:$0xff]
        %v1494 = vld [vmem:[%s1492 + $0x8] sm:$0xff]
        %v1495 = vsub.f32 %v1493, %v777
        %v1496 = vsub.f32 %v1494, %v778
        %v1497 = vmul.f32 %v1495, %v1495
        %v1498 = vmul.f32 %v1496, %v1496
        %v1499 = vadd.f32 %v1490, %v1497
        %v1500 = vadd.f32 %v1491, %v1498
        %s1501 = scalar_lea.vmem %s698, 336 [#allocation2]
        %v1502 = vld [vmem:[%s1501] sm:$0xff]
        %v1503 = vld [vmem:[%s1501 + $0x8] sm:$0xff]
        %s1504 = scalar_lea.vmem %s705, 336 [#allocation3]
        %v1505 = vld [vmem:[%s1504] sm:$0xff]
        %v1506 = vld [vmem:[%s1504 + $0x8] sm:$0xff]
        %v1507 = vsub.f32 %v1502, %v1505
        %v1508 = vsub.f32 %v1503, %v1506
        %v1509 = vmul.f32 %v1507, %v1507
        %v1510 = vmul.f32 %v1508, %v1508
        %v1511 = vadd.f32 %v1499, %v1509
        %v1512 = vadd.f32 %v1500, %v1510
        %s1513 = scalar_lea.vmem %s698, 352 [#allocation2]
        %v1514 = vld [vmem:[%s1513] sm:$0xff]
        %v1515 = vld [vmem:[%s1513 + $0x8] sm:$0xff]
        %s1516 = scalar_lea.vmem %s705, 352 [#allocation3]
        %v1517 = vld [vmem:[%s1516] sm:$0xff]
        %v1518 = vld [vmem:[%s1516 + $0x8] sm:$0xff]
        %v1519 = vsub.f32 %v1514, %v1517
        %v1520 = vsub.f32 %v1515, %v1518
        %v1521 = vmul.f32 %v1519, %v1519
        %v1522 = vmul.f32 %v1520, %v1520
        %v1523 = vadd.f32 %v1511, %v1521
        %v1524 = vadd.f32 %v1512, %v1522
        %s1525 = scalar_lea.vmem %s698, 368 [#allocation2]
        %v1526 = vld [vmem:[%s1525] sm:$0xff]
        %v1527 = vld [vmem:[%s1525 + $0x8] sm:$0xff]
        %s1528 = scalar_lea.vmem %s705, 368 [#allocation3]
        %v1529 = vld [vmem:[%s1528] sm:$0xff]
        %v1530 = vld [vmem:[%s1528 + $0x8] sm:$0xff]
        %v1531 = vsub.f32 %v1526, %v1529
        %v1532 = vsub.f32 %v1527, %v1530
        %v1533 = vmul.f32 %v1531, %v1531
        %v1534 = vmul.f32 %v1532, %v1532
        %v1535 = vadd.f32 %v1523, %v1533
        %v1536 = vadd.f32 %v1524, %v1534
        %s1537 = scalar_lea.vmem %s698, 384 [#allocation2]
        %v1538 = vld [vmem:[%s1537] sm:$0xff]
        %v1539 = vld [vmem:[%s1537 + $0x8] sm:$0xff]
        %s1540 = scalar_lea.vmem %s705, 384 [#allocation3]
        %v1541 = vld [vmem:[%s1540] sm:$0xff]
        %v1542 = vld [vmem:[%s1540 + $0x8] sm:$0xff]
        %v1543 = vsub.f32 %v1538, %v1541
        %v1544 = vsub.f32 %v1539, %v1542
        %v1545 = vmul.f32 %v1543, %v1543
        %v1546 = vmul.f32 %v1544, %v1544
        %v1547 = vadd.f32 %v1535, %v1545
        %v1548 = vadd.f32 %v1536, %v1546
        %s1549 = scalar_lea.vmem %s698, 400 [#allocation2]
        %v1550 = vld [vmem:[%s1549] sm:$0xff]
        %v1551 = vld [vmem:[%s1549 + $0x8] sm:$0xff]
        %s1552 = scalar_lea.vmem %s705, 400 [#allocation3]
        %v1553 = vld [vmem:[%s1552] sm:$0xff]
        %v1554 = vld [vmem:[%s1552 + $0x8] sm:$0xff]
        %v1555 = vsub.f32 %v1550, %v1553
        %v1556 = vsub.f32 %v1551, %v1554
        %v1557 = vmul.f32 %v1555, %v1555
        %v1558 = vmul.f32 %v1556, %v1556
        %v1559 = vadd.f32 %v1547, %v1557
        %v1560 = vadd.f32 %v1548, %v1558
        %s1561 = scalar_lea.vmem %s698, 416 [#allocation2]
        %v1562 = vld [vmem:[%s1561] sm:$0xff]
        %v1563 = vld [vmem:[%s1561 + $0x8] sm:$0xff]
        %s1564 = scalar_lea.vmem %s705, 416 [#allocation3]
        %v1565 = vld [vmem:[%s1564] sm:$0xff]
        %v1566 = vld [vmem:[%s1564 + $0x8] sm:$0xff]
        %v1567 = vsub.f32 %v1562, %v1565
        %v1568 = vsub.f32 %v1563, %v1566
        %v1569 = vmul.f32 %v1567, %v1567
        %v1570 = vmul.f32 %v1568, %v1568
        %v1571 = vadd.f32 %v1559, %v1569
        %v1572 = vadd.f32 %v1560, %v1570
        %s1573 = scalar_lea.vmem %s698, 432 [#allocation2]
        %v1574 = vld [vmem:[%s1573] sm:$0xff]
        %v1575 = vld [vmem:[%s1573 + $0x8] sm:$0xff]
        %s1576 = scalar_lea.vmem %s705, 432 [#allocation3]
        %v1577 = vld [vmem:[%s1576] sm:$0xff]
        %v1578 = vld [vmem:[%s1576 + $0x8] sm:$0xff]
        %v1579 = vsub.f32 %v1574, %v1577
        %v1580 = vsub.f32 %v1575, %v1578
        %v1581 = vmul.f32 %v1579, %v1579
        %v1582 = vmul.f32 %v1580, %v1580
        %v1583 = vadd.f32 %v1571, %v1581
        %v1584 = vadd.f32 %v1572, %v1582
        %s1585 = scalar_lea.vmem %s698, 448 [#allocation2]
        %v1586 = vld [vmem:[%s1585] sm:$0xff]
        %v1587 = vld [vmem:[%s1585 + $0x8] sm:$0xff]
        %s1588 = scalar_lea.vmem %s705, 448 [#allocation3]
        %v1589 = vld [vmem:[%s1588] sm:$0xff]
        %v1590 = vld [vmem:[%s1588 + $0x8] sm:$0xff]
        %v1591 = vsub.f32 %v1586, %v1589
        %v1592 = vsub.f32 %v1587, %v1590
        %v1593 = vmul.f32 %v1591, %v1591
        %v1594 = vmul.f32 %v1592, %v1592
        %v1595 = vadd.f32 %v1583, %v1593
        %v1596 = vadd.f32 %v1584, %v1594
        %s1597 = scalar_lea.vmem %s698, 464 [#allocation2]
        %v1598 = vld [vmem:[%s1597] sm:$0xff]
        %v1599 = vld [vmem:[%s1597 + $0x8] sm:$0xff]
        %s1600 = scalar_lea.vmem %s705, 464 [#allocation3]
        %v1601 = vld [vmem:[%s1600] sm:$0xff]
        %v1602 = vld [vmem:[%s1600 + $0x8] sm:$0xff]
        %v1603 = vsub.f32 %v1598, %v1601
        %v1604 = vsub.f32 %v1599, %v1602
        %v1605 = vmul.f32 %v1603, %v1603
        %v1606 = vmul.f32 %v1604, %v1604
        %v1607 = vadd.f32 %v1595, %v1605
        %v1608 = vadd.f32 %v1596, %v1606
        %v1609 = vmul.f32 %v981, 0.05102041
        %v1610 = vmul.f32 %v982, 0.05102041
        %v1611 = vmul.f32 %v991, 0.020408163
        %v1612 = vmul.f32 %v992, 0.020408163
        %v1613 = vadd.f32 %v1609, %v1611
        %v1614 = vadd.f32 %v1610, %v1612
        %v1615 = vmul.f32 %v1370, 0.000728863
        %v1616 = vmul.f32 %v1371, 0.000728863
        %v1617 = vadd.f32 %v1613, %v1615
        %v1618 = vadd.f32 %v1614, %v1616
        %v1619 = vmul.f32 %v777, %v777
        %v1620 = vmul.f32 %v778, %v778
        %v1621 = vmul.f32 %v1619, 0.0010204081
        %v1622 = vmul.f32 %v1620, 0.0010204081
        %v1623 = vmul.f32 %v1621, %v1607
        %v1624 = vmul.f32 %v1622, %v1608
        %v1625 = vadd.f32 %v1617, %v1623
        %v1626 = vadd.f32 %v1618, %v1624
        %v1627 = vsel %vm1022, %v1625, 0.0
        %1628 = vadd.xlane.f32.xlu0 %v1627
        %v1629 = vpop.xlane.xlu0 %1628
        %v1630 = vsel %vm1022, %v1626, 0.0
        %1631 = vadd.xlane.f32.xlu0 %v1630
        %v1632 = vpop.xlane.xlu0 %1631
        %v1633 = vadd.f32 %v1629, %v1632
        %v1634 = vrot.slane %v1633, 4
        %v1635 = vadd.f32 %v1633, %v1634
        %v1636 = vrot.slane %v1635, 2
        %v1637 = vadd.f32 %v1635, %v1636
        %v1638 = vrot.slane %v1637, 1
        %v1639 = vadd.f32 %v1637, %v1638
        %vm1640 = vcmask 0
        %1641 = vst.msk [vmem:[%s732] sm:$0x1] %vm1640, %v1639
        %p1642 = scmp.lt.s32.totalorder %s14, 1
        %s1643 = scalar_select %p1642, %s14, 1
        %s1644 = scalar_lea.vmem %s3, %s1643
        // Predicated region
        $region109: #{yolo_loss.1} parent=99 // pred_check
          %p1645 = pneg %p105
        $region110: #{yolo_loss.1} parent=99 // pred_check_branch
          %1647 = sbr.rel (%p1645) target = $region112
        $region111: #{yolo_loss.1} parent=99 // pred_region
          _
        $region112: #{yolo_loss.1} parent=99 // pred_fallthru
          _
      $region100: #{yolo_loss.1} parent=5 // pred_fallthru
        _
      %p1648 = scmp.le.s32.totalorder 2, %s9
      // Predicated region
      $region113: #{yolo_loss.1} parent=5 // pred_check
        %p1649 = pneg %p1648
      $region114: #{yolo_loss.1} parent=5 // pred_check_branch
        %1651 = sbr.rel (%p1649) target = $region116
      $region115: #{yolo_loss.1} parent=5 // pred_region
        %s1652 = ssub.s32 %s9, 2
        // Predicated region
        $region117: #{yolo_loss.1} parent=115 // pred_check
          %p1653 = pneg %p111
        $region118: #{yolo_loss.1} parent=115 // pred_check_branch
          %1655 = sbr.rel (%p1653) target = $region120
        $region119: #{yolo_loss.1} parent=115 // pred_region
          %p1656 = scmp.lt.s32.totalorder %s15, 1
          %s1657 = scalar_select %p1656, %s15, 1
          %s1658 = scalar_lea.vmem %s3, %s1657
        $region120: #{yolo_loss.1} parent=115 // pred_fallthru
          _
      $region116: #{yolo_loss.1} parent=5 // pred_fallthru
        _
    $region6: #{yolo_loss.1} parent=1 // loop_footer
      %s13 = sadd.s32 1, %s9
    $region7: #{yolo_loss.1} parent=1 // loop_footer_branch
      %8 = sbr.rel target = $region3
    $region8: #{yolo_loss.1} parent=1 // loop_exit
      _

</llo_original>
